<compile_context>
chip_gen: v7x
topology: tpu7x:2x2x1
jax: 0.10.0
libtpu: 0.0.40
codegen_flags: <defaults>
</compile_context>

<pallas_src>
import numpy as np
import jax
import jax.numpy as jnp
from jax.experimental import pallas as pl
from jax.experimental.pallas import tpu as pltpu


# ---------------------------------------------------------------------------
# Kernel
# ---------------------------------------------------------------------------
def _attention_kernel(g_ref, x_ref, wg_ref, wx_ref, wp_ref, bgx_ref, bp_ref,
                      out_ref):
    # g/x tiles are (tm, F_g)/(tm, F_l) in the compute dtype (bf16 by default);
    # matmuls accumulate in f32 on the MXU.
    g1 = jnp.dot(g_ref[...], wg_ref[...], preferred_element_type=jnp.float32)
    x1 = jnp.dot(x_ref[...], wx_ref[...], preferred_element_type=jnp.float32)

    # BN scales are folded into the weight columns; one fused bias remains.
    h = jnp.maximum(g1 + x1 + bgx_ref[...], 0.0)             # (tm, F_int_p) f32

    # psi conv has output width 1: VPU multiply + lane (XLU) reduce instead of
    # a 1-lane-wide MXU matmul.
    psi = jnp.sum(h * wp_ref[...], axis=-1, keepdims=True) + bp_ref[0]
    psi = jax.nn.sigmoid(psi)                                 # (tm, 1) f32

    out_ref[...] = (x_ref[...].astype(jnp.float32) * psi).astype(out_ref.dtype)


# ---------------------------------------------------------------------------
# Tiling / VMEM sizing helpers
# ---------------------------------------------------------------------------
def _round_up(v, m):
    return (v + m - 1) // m * m


def _vmem_bytes_estimate(tm, F_g, F_l, F_int_p, in_bytes):
    dbl = 2  # double-buffered pipelined blocks
    blocks = dbl * tm * (F_g + F_l) * in_bytes + dbl * tm * F_l * 4   # in + out
    weights = dbl * ((F_g + F_l) * F_int_p * in_bytes + 2 * F_int_p * 4) + 4096
    interm = 4 * tm * F_int_p * 4          # g1, x1, h, h*wp f32 intermediates
    return blocks + weights + interm


def _choose_tm(M, tm_max, F_g, F_l, F_int_p, in_bytes, vmem_budget,
               min_steps=8):
    # Large tiles (256..1024 rows) amortize per-grid-step overhead, but keep
    # ~min_steps grid steps so the "parallel" axis can be sharded across both
    # v7x TensorCores, and stay inside the VMEM budget.
    tm = min(tm_max, max(256, _round_up(pl.cdiv(M, min_steps), 256)))
    tm = min(tm, _round_up(M, 8))          # never exceed (sublane-padded) M
    while tm > 256 and _vmem_bytes_estimate(tm, F_g, F_l, F_int_p,
                                            in_bytes) > vmem_budget:
        tm = max(256, _round_up(tm // 2, 8))
    return max(8, tm)


# ---------------------------------------------------------------------------
# pallas_call wrapper (pixel-matrix / NHWC-flat entry point — no transposes)
# ---------------------------------------------------------------------------
def attention_block_pixels(g_pix, x_pix, wg_s, wx_s, wp_row, bgx, bp, *,
                           tm=1024):
    """Fused attention gate on pixel matrices.

    g_pix: (M, F_g), x_pix: (M, F_l)              compute dtype (bf16/f32)
    wg_s:  (F_g, F_int_p), wx_s: (F_l, F_int_p)   BN-scale folded, compute dtype
    wp_row:(1, F_int_p) f32, bgx: (1, F_int_p) f32, bp: (1,) f32
    Returns (M, F_l) f32.
    """
    M, F_g = g_pix.shape
    _, F_l = x_pix.shape
    F_int_p = wg_s.shape[1]
    in_bytes = g_pix.dtype.itemsize

    vmem_budget = 24 * 1024 * 1024        # conservative across v5e/v6e/v7x
    tm = _choose_tm(M, tm, F_g, F_l, F_int_p, in_bytes, vmem_budget)
    grid_m = pl.cdiv(M, tm)               # last tile masked if M % tm != 0

    est = _vmem_bytes_estimate(tm, F_g, F_l, F_int_p, in_bytes)
    vmem_limit = int(min(48 * 1024 * 1024, max(32 * 1024 * 1024, 2 * est)))

    row = lambda i: (i, 0)                # streamed row tiles
    full = lambda i: (0, 0)               # resident weights / biases

    return pl.pallas_call(
        _attention_kernel,
        out_shape=jax.ShapeDtypeStruct((M, F_l), jnp.float32),
        grid_spec=pltpu.PrefetchScalarGridSpec(
            num_scalar_prefetch=0,
            grid=(grid_m,),
            in_specs=[
                pl.BlockSpec((tm, F_g), row),            # g pixels (streamed)
                pl.BlockSpec((tm, F_l), row),            # x pixels (streamed)
                pl.BlockSpec((F_g, F_int_p), full),      # W_g^T * s_g (resident)
                pl.BlockSpec((F_l, F_int_p), full),      # W_x^T * s_x (resident)
                pl.BlockSpec((1, F_int_p), full),        # W_psi * s_p (row vec)
                pl.BlockSpec((1, F_int_p), full),        # fused bias b_g + b_x
                pl.BlockSpec(memory_space=pltpu.MemorySpace.SMEM),  # b_psi
            ],
            out_specs=pl.BlockSpec((tm, F_l), row),
        ),
        compiler_params=pltpu.CompilerParams(
            dimension_semantics=("parallel",),
            vmem_limit_bytes=vmem_limit,
        ),
    )(g_pix, x_pix, wg_s, wx_s, wp_row, bgx, bp)


# ---------------------------------------------------------------------------
# Parameter preparation (BN folding into weights) and NCHW entry point
# ---------------------------------------------------------------------------
def fold_bn(gamma, beta, running_mean, running_var, eps=1e-5):
    scale = gamma / jnp.sqrt(running_var + eps)
    bias = beta - running_mean * scale
    return scale, bias


def prepare_params(params, *, compute_dtype=jnp.bfloat16):
    """Fold eval-mode BN into the 1x1-conv weights; pad F_int to a multiple of
    128 (zeros — exact) so intermediate tiles are lane-dense."""
    wg, wx, wp = params["wg"], params["wx"], params["wp"]   # (C_out, C_in)
    sg, bg = fold_bn(*params["bn_g"])
    sx, bx = fold_bn(*params["bn_x"])
    sp, bp = fold_bn(*params["bn_p"])

    F_int = wg.shape[0]
    F_int_p = _round_up(F_int, 128)
    pad = F_int_p - F_int

    wg_s = wg.T * sg[None, :]                               # (F_g, F_int)
    wx_s = wx.T * sx[None, :]                               # (F_l, F_int)
    wp_row = (wp * sp.reshape(-1, 1)).reshape(1, F_int)     # (1, F_int)
    bgx = (bg + bx).reshape(1, F_int)

    if pad:
        wg_s = jnp.pad(wg_s, ((0, 0), (0, pad)))
        wx_s = jnp.pad(wx_s, ((0, 0), (0, pad)))
        wp_row = jnp.pad(wp_row, ((0, 0), (0, pad)))
        bgx = jnp.pad(bgx, ((0, 0), (0, pad)))

    return dict(
        wg_s=wg_s.astype(compute_dtype),
        wx_s=wx_s.astype(compute_dtype),
        wp_row=wp_row.astype(jnp.float32),
        bgx=bgx.astype(jnp.float32),
        bp=bp.reshape(1).astype(jnp.float32),
    )


def attention_block(g_nchw, x_nchw, params, *, tm=1024,
                    compute_dtype=jnp.bfloat16):
    """PyTorch-compatible NCHW entry point (eval-mode BatchNorm).

    NOTE: the NCHW<->NHWC transposes below each cost a full HBM pass; in a real
    pipeline keep the surrounding graph in NHWC (or call attention_block_pixels
    directly) so this bandwidth-bound op sees only one pass per tensor.
    """
    N, F_g, H, W = g_nchw.shape
    _, F_l, _, _ = x_nchw.shape
    M = N * H * W

    g_pix = jnp.transpose(g_nchw, (0, 2, 3, 1)).reshape(M, F_g)
    x_pix = jnp.transpose(x_nchw, (0, 2, 3, 1)).reshape(M, F_l)
    g_pix = g_pix.astype(compute_dtype)
    x_pix = x_pix.astype(compute_dtype)

    folded = prepare_params(params, compute_dtype=compute_dtype)
    out_pix = attention_block_pixels(
        g_pix, x_pix, folded["wg_s"], folded["wx_s"], folded["wp_row"],
        folded["bgx"], folded["bp"], tm=tm)
    return jnp.transpose(out_pix.reshape(N, H, W, F_l), (0, 3, 1, 2))


# ---------------------------------------------------------------------------
# Pure-JAX reference and self-test
# ---------------------------------------------------------------------------
def attention_block_ref(g_nchw, x_nchw, params):
    """Pure-JAX reference (eval-mode BN), NCHW."""
    def conv1x1(inp, w):  # inp: (N,Cin,H,W), w: (Cout,Cin)
        return jnp.einsum("nchw,oc->nohw", inp, w)

    def bn(inp, gamma, beta, mean, var, eps=1e-5):
        g_ = gamma.reshape(1, -1, 1, 1)
        b_ = beta.reshape(1, -1, 1, 1)
        m_ = mean.reshape(1, -1, 1, 1)
        v_ = var.reshape(1, -1, 1, 1)
        return (inp - m_) / jnp.sqrt(v_ + eps) * g_ + b_

    g1 = bn(conv1x1(g_nchw, params["wg"]), *params["bn_g"])
    x1 = bn(conv1x1(x_nchw, params["wx"]), *params["bn_x"])
    psi = jax.nn.sigmoid(bn(conv1x1(jnp.maximum(g1 + x1, 0.0), params["wp"]),
                            *params["bn_p"]))
    return x_nchw * psi


def make_params(key, F_g, F_l, F_int):
    ks = jax.random.split(key, 9)
    return {
        "wg": jax.random.normal(ks[0], (F_int, F_g), jnp.float32) * 0.2,
        "wx": jax.random.normal(ks[1], (F_int, F_l), jnp.float32) * 0.2,
        "wp": jax.random.normal(ks[2], (1, F_int), jnp.float32) * 0.2,
        # BN params: (gamma, beta, running_mean, running_var)
        "bn_g": (1.0 + 0.1 * jax.random.normal(ks[3], (F_int,), jnp.float32),
                 0.1 * jax.random.normal(ks[4], (F_int,), jnp.float32),
                 0.05 * jax.random.normal(ks[5], (F_int,), jnp.float32),
                 jnp.abs(1.0 + 0.1 * jax.random.normal(ks[6], (F_int,),
                                                       jnp.float32))),
        "bn_x": (1.0 + 0.1 * jax.random.normal(ks[7], (F_int,), jnp.float32),
                 0.1 * jax.random.normal(ks[8], (F_int,), jnp.float32),
                 jnp.zeros((F_int,), jnp.float32),
                 jnp.ones((F_int,), jnp.float32)),
        "bn_p": (jnp.ones((1,), jnp.float32),
                 jnp.zeros((1,), jnp.float32),
                 jnp.zeros((1,), jnp.float32),
                 jnp.ones((1,), jnp.float32)),
    }


if __name__ == "__main__":
    key = jax.random.PRNGKey(0)
    k_g, k_x, k_p = jax.random.split(key, 3)

    N, F_g, F_l, F_int, H, W = 2, 4, 4, 8, 16, 16
    g = jax.random.normal(k_g, (N, F_g, H, W), jnp.float32)
    x = jax.random.normal(k_x, (N, F_l, H, W), jnp.float32)
    params = make_params(k_p, F_g, F_l, F_int)

    ref = attention_block_ref(g, x, params)

    # Exactness check of the fused/folded kernel in f32.
    out_f32 = jax.block_until_ready(
        attention_block(g, x, params, compute_dtype=jnp.float32))
    np.testing.assert_allclose(np.asarray(out_f32), np.asarray(ref),
                               rtol=1e-5, atol=1e-5)

    # Default (bf16 inputs/weights, f32 accumulation) — bandwidth-optimized path.
    out_bf16 = jax.block_until_ready(
        attention_block(g, x, params, compute_dtype=jnp.bfloat16))
    np.testing.assert_allclose(np.asarray(out_bf16), np.asarray(ref),
                               rtol=2e-2, atol=2e-2)

    print("KERNEL_OK")
</pallas_src>

<mosaic_0001>
module attributes {stable_mosaic.version = 11 : i64} {
  func.func @_attention_kernel(%arg0: i32, %arg1: memref<256x4xf32, #tpu.memory_space<vmem>>, %arg2: memref<256x4xf32, #tpu.memory_space<vmem>>, %arg3: memref<4x128xf32, #tpu.memory_space<vmem>>, %arg4: memref<4x128xf32, #tpu.memory_space<vmem>>, %arg5: memref<1x128xf32, #tpu.memory_space<vmem>>, %arg6: memref<1x128xf32, #tpu.memory_space<vmem>>, %arg7: memref<1xf32, #tpu.memory_space<smem>>, %arg8: memref<256x4xf32, #tpu.memory_space<vmem>>) attributes {dimension_semantics = [#tpu.dimension_semantics<parallel>], iteration_bounds = array<i64: 2>, scalar_prefetch = 0 : i64, scratch_operands = 0 : i64, tpu.core_type = #tpu.core_type<tc>, window_params = [{transform_indices = @transform_0, window_bounds = array<i64: 256, 4>}, {transform_indices = @transform_1, window_bounds = array<i64: 256, 4>}, {pipeline_mode = #tpu.pipeline_mode<synchronous>, transform_indices = @transform_2, window_bounds = array<i64: 4, 128>}, {pipeline_mode = #tpu.pipeline_mode<synchronous>, transform_indices = @transform_3, window_bounds = array<i64: 4, 128>}, {pipeline_mode = #tpu.pipeline_mode<synchronous>, transform_indices = @transform_4, window_bounds = array<i64: 1, 128>}, {pipeline_mode = #tpu.pipeline_mode<synchronous>, transform_indices = @transform_5, window_bounds = array<i64: 1, 128>}, {transform_indices = @transform_6, window_bounds = array<i64: 1>}, {transform_indices = @transform_7, window_bounds = array<i64: 256, 4>}]} {
    %c0 = arith.constant 0 : index
    %c0_0 = arith.constant 0 : index
    %0 = vector.load %arg1[%c0, %c0_0] : memref<256x4xf32, #tpu.memory_space<vmem>>, vector<256x4xf32>
    %c0_1 = arith.constant 0 : index
    %c0_2 = arith.constant 0 : index
    %1 = vector.load %arg3[%c0_1, %c0_2] : memref<4x128xf32, #tpu.memory_space<vmem>>, vector<4x128xf32>
    %cst = arith.constant dense<0.000000e+00> : vector<256x128xf32>
    %2 = tpu.matmul %0, %1, %cst {dimension_numbers = #tpu.dot_dimension_numbers<[1], [0], [0], [1], [0, 0, 1, 1], [], []>} : vector<256x4xf32>, vector<4x128xf32>, vector<256x128xf32> -> vector<256x128xf32>
    %c0_3 = arith.constant 0 : index
    %c0_4 = arith.constant 0 : index
    %3 = vector.load %arg2[%c0_3, %c0_4] : memref<256x4xf32, #tpu.memory_space<vmem>>, vector<256x4xf32>
    %c0_5 = arith.constant 0 : index
    %c0_6 = arith.constant 0 : index
    %4 = vector.load %arg4[%c0_5, %c0_6] : memref<4x128xf32, #tpu.memory_space<vmem>>, vector<4x128xf32>
    %cst_7 = arith.constant dense<0.000000e+00> : vector<256x128xf32>
    %5 = tpu.matmul %3, %4, %cst_7 {dimension_numbers = #tpu.dot_dimension_numbers<[1], [0], [0], [1], [0, 0, 1, 1], [], []>} : vector<256x4xf32>, vector<4x128xf32>, vector<256x128xf32> -> vector<256x128xf32>
    %6 = arith.addf %2, %5 : vector<256x128xf32>
    %c0_8 = arith.constant 0 : index
    %c0_9 = arith.constant 0 : index
    %7 = vector.load %arg6[%c0_8, %c0_9] : memref<1x128xf32, #tpu.memory_space<vmem>>, vector<1x128xf32>
    %8 = vector.broadcast %7 : vector<1x128xf32> to vector<256x128xf32>
    %9 = arith.addf %6, %8 : vector<256x128xf32>
    %cst_10 = arith.constant 0.000000e+00 : f32
    %10 = vector.broadcast %cst_10 : f32 to vector<256x128xf32>
    %11 = arith.maximumf %9, %10 : vector<256x128xf32>
    %c0_11 = arith.constant 0 : index
    %c0_12 = arith.constant 0 : index
    %12 = vector.load %arg5[%c0_11, %c0_12] : memref<1x128xf32, #tpu.memory_space<vmem>>, vector<1x128xf32>
    %13 = vector.broadcast %12 : vector<1x128xf32> to vector<256x128xf32>
    %14 = arith.mulf %11, %13 : vector<256x128xf32>
    %cst_13 = arith.constant dense<0.000000e+00> : vector<256xf32>
    %15 = vector.multi_reduction <add>, %14, %cst_13 [1] : vector<256x128xf32> to vector<256xf32>
    %16 = vector.shape_cast %15 : vector<256xf32> to vector<256x1xf32>
    %c0_14 = arith.constant 0 : index
    %17 = memref.load %arg7[%c0_14] : memref<1xf32, #tpu.memory_space<smem>>
    %18 = vector.broadcast %17 : f32 to vector<256x1xf32>
    %19 = arith.addf %16, %18 : vector<256x1xf32>
    %20 = arith.negf %19 : vector<256x1xf32>
    %21 = math.exp %20 : vector<256x1xf32>
    %cst_15 = arith.constant 1.000000e+00 : f32
    %22 = vector.broadcast %cst_15 : f32 to vector<256x1xf32>
    %23 = arith.addf %22, %21 : vector<256x1xf32>
    %24 = arith.divf %22, %23 : vector<256x1xf32>
    %c0_16 = arith.constant 0 : index
    %c0_17 = arith.constant 0 : index
    %25 = vector.load %arg2[%c0_16, %c0_17] : memref<256x4xf32, #tpu.memory_space<vmem>>, vector<256x4xf32>
    %26 = vector.broadcast %24 : vector<256x1xf32> to vector<256x4xf32>
    %27 = arith.mulf %25, %26 : vector<256x4xf32>
    %c0_18 = arith.constant 0 : index
    %c0_19 = arith.constant 0 : index
    %28 = vector.load %arg8[%c0_18, %c0_19] : memref<256x4xf32, #tpu.memory_space<vmem>>, vector<256x4xf32>
    tpu.vector_store %arg8[%c0_18, %c0_19], %27 {strides = array<i32>} : memref<256x4xf32, #tpu.memory_space<vmem>>, vector<256x4xf32>,
    return
  }
  func.func @transform_0(%arg0: i32) -> (i32, i32) {
    %c0_i32 = arith.constant 0 : i32
    %c0_i32_0 = arith.constant 0 : i32
    return %arg0, %c0_i32 : i32, i32
  }
  func.func @transform_1(%arg0: i32) -> (i32, i32) {
    %c0_i32 = arith.constant 0 : i32
    %c0_i32_0 = arith.constant 0 : i32
    return %arg0, %c0_i32 : i32, i32
  }
  func.func @transform_2(%arg0: i32) -> (i32, i32) {
    %c0_i32 = arith.constant 0 : i32
    %c0_i32_0 = arith.constant 0 : i32
    %c0_i32_1 = arith.constant 0 : i32
    return %c0_i32, %c0_i32_0 : i32, i32
  }
  func.func @transform_3(%arg0: i32) -> (i32, i32) {
    %c0_i32 = arith.constant 0 : i32
    %c0_i32_0 = arith.constant 0 : i32
    %c0_i32_1 = arith.constant 0 : i32
    return %c0_i32, %c0_i32_0 : i32, i32
  }
  func.func @transform_4(%arg0: i32) -> (i32, i32) {
    %c0_i32 = arith.constant 0 : i32
    %c0_i32_0 = arith.constant 0 : i32
    %c0_i32_1 = arith.constant 0 : i32
    return %c0_i32, %c0_i32_0 : i32, i32
  }
  func.func @transform_5(%arg0: i32) -> (i32, i32) {
    %c0_i32 = arith.constant 0 : i32
    %c0_i32_0 = arith.constant 0 : i32
    %c0_i32_1 = arith.constant 0 : i32
    return %c0_i32, %c0_i32_0 : i32, i32
  }
  func.func @transform_6(%arg0: i32) -> i32 {
    %c0_i32 = arith.constant 0 : i32
    %c0_i32_0 = arith.constant 0 : i32
    return %c0_i32 : i32
  }
  func.func @transform_7(%arg0: i32) -> (i32, i32) {
    %c0_i32 = arith.constant 0 : i32
    %c0_i32_0 = arith.constant 0 : i32
    return %arg0, %c0_i32 : i32, i32
  }
}

</mosaic_0001>

<llo_original>
// kernel: tpu_custom_call.1
$region0: #{tpu_custom_call.1}
  #allocation0 [shape = 'u32[]', space=smem, size = 0x4, offset = 0x4, fixed_abs, tag = 'smem constant byte address 0x4 - core index']
  #allocation1 [shape = 'u32[144,128]{1,0:T(1,128)}', space=vmem, size = 0x12000, scoped, tag = 'internal scratch']
  #allocation2 [shape = 'f32[1]{0:T(128)S(6)}', space=smem, size = 0x200, scoped, tag = 'scoped memory for tpu_custom_call.1']
  %s0 = inlined_call_operand.vmem [shape: f32[512,4], index: 0, kind: input, shape index: {}]
  %s1 = inlined_call_operand.vmem [shape: f32[512,4], index: 1, kind: input, shape index: {}]
  %s2 = inlined_call_operand.vmem [shape: f32[4,128], index: 2, kind: input, shape index: {}]
  %s3 = inlined_call_operand.vmem [shape: f32[4,128], index: 3, kind: input, shape index: {}]
  %s4 = inlined_call_operand.vmem [shape: f32[1,128], index: 4, kind: input, shape index: {}]
  %s5 = inlined_call_operand.vmem [shape: f32[1,128], index: 5, kind: input, shape index: {}]
  %s6 = inlined_call_operand.<no memory space> [shape: f32[1], index: 6, kind: input, shape index: {}]
  %s7 = inlined_call_operand.vmem [shape: f32[512,4], index: 7, kind: output, shape index: {}]
  %s8 = sld [smem:[#allocation0]]
  $region61: #{tpu_custom_call.1} parent=0
    _
  %s10 = ssub.s32 1, %s8
  %s11 = scalar_select 0, %s10, %s8
  %12 = sst [smem:[#allocation2]] %s6
  loop: start=0, step=1, limit=4
  $region2: #{tpu_custom_call.1} parent=0 // loop_pre_header
    _
  $region3: #{tpu_custom_call.1} parent=0 // loop_header
    %s14 = sphi 0, %s18
    %p15 = scmp.ge.s32.totalorder %s14, 4
    %s24 = sphi 0, %s26
    %s27 = sphi 0, %s24
    %s28 = sphi 0, %s27
    %s44 = sphi 0, %s28
    %s50 = sphi 0, %s52
    %s53 = sphi 0, %s50
    %s54 = sphi 0, %s53
    %s70 = sphi 0, %s54
    %s74 = sphi 0, %s74
    %s76 = sphi 0, %s74
    %s77 = sphi 0, %s76
    %s91 = sphi 0, %s77
    %s95 = sphi 0, %s95
    %s97 = sphi 0, %s95
    %s98 = sphi 0, %s97
    %s112 = sphi 0, %s98
    %s116 = sphi 0, %s116
    %s118 = sphi 0, %s116
    %s119 = sphi 0, %s118
    %s133 = sphi 0, %s119
    %s137 = sphi 0, %s137
    %s139 = sphi 0, %s137
    %s140 = sphi 0, %s139
    %s154 = sphi 0, %s140
    %s158 = sphi 0, %s158
    %s160 = sphi 0, %s158
    %s161 = sphi 0, %s160
    %s175 = sphi 0, %s161
    %s181 = sphi 0, %s183
    %s184 = sphi 0, %s181
    %s185 = sphi 0, %s184
    %s201 = sphi 0, %s185
  $region4: #{tpu_custom_call.1} parent=0 // loop_header_branch
    %17 = sbr.rel (%p15) target = $region8
  $region5: #{tpu_custom_call.1} parent=0 // loop_body
    %s19 = ssub.s32 %s14, 1
    %s20 = ssub.s32 %s14, 2
    %s21 = sadd.s32 %s14, 1
    %s22 = ssub.s32 %s14, %s21
    %p23 = scmp.eq.s32.totalorder %s22, 0
    %s25 = sadd.s32 %s24, 1
    %s26 = scalar_select %p23, %s24, %s25
    %p29 = pneg %p23
    %p30 = scmp.eq.s32.totalorder %s14, 1
    %p31 = por %p29, %p30
    %p32 = scmp.ne.s32.totalorder %s24, %s27
    %p33 = scmp.eq.s32.totalorder %s14, 0
    %p34 = por %p32, %p33
    %p35 = scmp.ne.s32.totalorder %s24, %s27
    %p36 = scmp.eq.s32.totalorder %s19, 1
    %p37 = por %p35, %p36
    %p38 = scmp.ne.s32.totalorder %s27, %s28
    %p39 = scmp.eq.s32.totalorder %s19, 0
    %p40 = por %p38, %p39
    %p41 = scmp.ne.s32.totalorder %s27, %s28
    %p42 = scmp.eq.s32.totalorder %s20, 1
    %p43 = por %p41, %p42
    %p45 = scmp.ne.s32.totalorder %s28, %s44
    %p46 = scmp.eq.s32.totalorder %s20, 0
    %p47 = por %p45, %p46
    %s48 = ssub.s32 %s14, %s21
    %p49 = scmp.eq.s32.totalorder %s48, 0
    %s51 = sadd.s32 %s50, 1
    %s52 = scalar_select %p49, %s50, %s51
    %p55 = pneg %p49
    %p56 = scmp.eq.s32.totalorder %s14, 1
    %p57 = por %p55, %p56
    %p58 = scmp.ne.s32.totalorder %s50, %s53
    %p59 = scmp.eq.s32.totalorder %s14, 0
    %p60 = por %p58, %p59
    %p61 = scmp.ne.s32.totalorder %s50, %s53
    %p62 = scmp.eq.s32.totalorder %s19, 1
    %p63 = por %p61, %p62
    %p64 = scmp.ne.s32.totalorder %s53, %s54
    %p65 = scmp.eq.s32.totalorder %s19, 0
    %p66 = por %p64, %p65
    %p67 = scmp.ne.s32.totalorder %s53, %s54
    %p68 = scmp.eq.s32.totalorder %s20, 1
    %p69 = por %p67, %p68
    %p71 = scmp.ne.s32.totalorder %s54, %s70
    %p72 = scmp.eq.s32.totalorder %s20, 0
    %p73 = por %p71, %p72
    %s75 = sadd.s32 %s74, 1
    %p78 = scmp.eq.s32.totalorder %s14, 1
    %p79 = scmp.ne.s32.totalorder %s74, %s76
    %p80 = scmp.eq.s32.totalorder %s14, 0
    %p81 = por %p79, %p80
    %p82 = scmp.ne.s32.totalorder %s74, %s76
    %p83 = scmp.eq.s32.totalorder %s19, 1
    %p84 = por %p82, %p83
    %p85 = scmp.ne.s32.totalorder %s76, %s77
    %p86 = scmp.eq.s32.totalorder %s19, 0
    %p87 = por %p85, %p86
    %p88 = scmp.ne.s32.totalorder %s76, %s77
    %p89 = scmp.eq.s32.totalorder %s20, 1
    %p90 = por %p88, %p89
    %p92 = scmp.ne.s32.totalorder %s77, %s91
    %p93 = scmp.eq.s32.totalorder %s20, 0
    %p94 = por %p92, %p93
    %s96 = sadd.s32 %s95, 1
    %p99 = scmp.eq.s32.totalorder %s14, 1
    %p100 = scmp.ne.s32.totalorder %s95, %s97
    %p101 = scmp.eq.s32.totalorder %s14, 0
    %p102 = por %p100, %p101
    %p103 = scmp.ne.s32.totalorder %s95, %s97
    %p104 = scmp.eq.s32.totalorder %s19, 1
    %p105 = por %p103, %p104
    %p106 = scmp.ne.s32.totalorder %s97, %s98
    %p107 = scmp.eq.s32.totalorder %s19, 0
    %p108 = por %p106, %p107
    %p109 = scmp.ne.s32.totalorder %s97, %s98
    %p110 = scmp.eq.s32.totalorder %s20, 1
    %p111 = por %p109, %p110
    %p113 = scmp.ne.s32.totalorder %s98, %s112
    %p114 = scmp.eq.s32.totalorder %s20, 0
    %p115 = por %p113, %p114
    %s117 = sadd.s32 %s116, 1
    %p120 = scmp.eq.s32.totalorder %s14, 1
    %p121 = scmp.ne.s32.totalorder %s116, %s118
    %p122 = scmp.eq.s32.totalorder %s14, 0
    %p123 = por %p121, %p122
    %p124 = scmp.ne.s32.totalorder %s116, %s118
    %p125 = scmp.eq.s32.totalorder %s19, 1
    %p126 = por %p124, %p125
    %p127 = scmp.ne.s32.totalorder %s118, %s119
    %p128 = scmp.eq.s32.totalorder %s19, 0
    %p129 = por %p127, %p128
    %p130 = scmp.ne.s32.totalorder %s118, %s119
    %p131 = scmp.eq.s32.totalorder %s20, 1
    %p132 = por %p130, %p131
    %p134 = scmp.ne.s32.totalorder %s119, %s133
    %p135 = scmp.eq.s32.totalorder %s20, 0
    %p136 = por %p134, %p135
    %s138 = sadd.s32 %s137, 1
    %p141 = scmp.eq.s32.totalorder %s14, 1
    %p142 = scmp.ne.s32.totalorder %s137, %s139
    %p143 = scmp.eq.s32.totalorder %s14, 0
    %p144 = por %p142, %p143
    %p145 = scmp.ne.s32.totalorder %s137, %s139
    %p146 = scmp.eq.s32.totalorder %s19, 1
    %p147 = por %p145, %p146
    %p148 = scmp.ne.s32.totalorder %s139, %s140
    %p149 = scmp.eq.s32.totalorder %s19, 0
    %p150 = por %p148, %p149
    %p151 = scmp.ne.s32.totalorder %s139, %s140
    %p152 = scmp.eq.s32.totalorder %s20, 1
    %p153 = por %p151, %p152
    %p155 = scmp.ne.s32.totalorder %s140, %s154
    %p156 = scmp.eq.s32.totalorder %s20, 0
    %p157 = por %p155, %p156
    %s159 = sadd.s32 %s158, 1
    %p162 = scmp.eq.s32.totalorder %s14, 1
    %p163 = scmp.ne.s32.totalorder %s158, %s160
    %p164 = scmp.eq.s32.totalorder %s14, 0
    %p165 = por %p163, %p164
    %p166 = scmp.ne.s32.totalorder %s158, %s160
    %p167 = scmp.eq.s32.totalorder %s19, 1
    %p168 = por %p166, %p167
    %p169 = scmp.ne.s32.totalorder %s160, %s161
    %p170 = scmp.eq.s32.totalorder %s19, 0
    %p171 = por %p169, %p170
    %p172 = scmp.ne.s32.totalorder %s160, %s161
    %p173 = scmp.eq.s32.totalorder %s20, 1
    %p174 = por %p172, %p173
    %p176 = scmp.ne.s32.totalorder %s161, %s175
    %p177 = scmp.eq.s32.totalorder %s20, 0
    %p178 = por %p176, %p177
    %s179 = ssub.s32 %s14, %s21
    %p180 = scmp.eq.s32.totalorder %s179, 0
    %s182 = sadd.s32 %s181, 1
    %s183 = scalar_select %p180, %s181, %s182
    %p186 = pneg %p180
    %p187 = scmp.eq.s32.totalorder %s14, 1
    %p188 = por %p186, %p187
    %p189 = scmp.ne.s32.totalorder %s181, %s184
    %p190 = scmp.eq.s32.totalorder %s14, 0
    %p191 = por %p189, %p190
    %p192 = scmp.ne.s32.totalorder %s181, %s184
    %p193 = scmp.eq.s32.totalorder %s19, 1
    %p194 = por %p192, %p193
    %p195 = scmp.ne.s32.totalorder %s184, %s185
    %p196 = scmp.eq.s32.totalorder %s19, 0
    %p197 = por %p195, %p196
    %p198 = scmp.ne.s32.totalorder %s184, %s185
    %p199 = scmp.eq.s32.totalorder %s20, 1
    %p200 = por %p198, %p199
    %p202 = scmp.ne.s32.totalorder %s185, %s201
    %p203 = scmp.eq.s32.totalorder %s20, 0
    %p204 = por %p202, %p203
    %p205 = scmp.le.s32.totalorder 1, %s14
    %p206 = scmp.lt.s32.totalorder %s14, 3
    %p207 = pnand %p205, %p206
    %p208 = pneg %p207
    // Predicated region
    $region9: #{tpu_custom_call.1} parent=5 // pred_check
      _
    $region10: #{tpu_custom_call.1} parent=5 // pred_check_branch
      %210 = sbr.rel (%p207) target = $region12
    $region11: #{tpu_custom_call.1} parent=5 // pred_region
      %s211 = ssub.s32 %s14, 1
      // Predicated region
      $region13: #{tpu_custom_call.1} parent=11 // pred_check
        %p212 = pneg %p87
      $region14: #{tpu_custom_call.1} parent=11 // pred_check_branch
        %214 = sbr.rel (%p212) target = $region16
      $region15: #{tpu_custom_call.1} parent=11 // pred_region
        _
      $region16: #{tpu_custom_call.1} parent=11 // pred_fallthru
        _
      // Predicated region
      $region17: #{tpu_custom_call.1} parent=11 // pred_check
        %p215 = pneg %p108
      $region18: #{tpu_custom_call.1} parent=11 // pred_check_branch
        %217 = sbr.rel (%p215) target = $region20
      $region19: #{tpu_custom_call.1} parent=11 // pred_region
        _
      $region20: #{tpu_custom_call.1} parent=11 // pred_fallthru
        _
      // Predicated region
      $region21: #{tpu_custom_call.1} parent=11 // pred_check
        %p218 = pneg %p129
      $region22: #{tpu_custom_call.1} parent=11 // pred_check_branch
        %220 = sbr.rel (%p218) target = $region24
      $region23: #{tpu_custom_call.1} parent=11 // pred_region
        _
      $region24: #{tpu_custom_call.1} parent=11 // pred_fallthru
        _
      // Predicated region
      $region25: #{tpu_custom_call.1} parent=11 // pred_check
        %p221 = pneg %p150
      $region26: #{tpu_custom_call.1} parent=11 // pred_check_branch
        %223 = sbr.rel (%p221) target = $region28
      $region27: #{tpu_custom_call.1} parent=11 // pred_region
        _
      $region28: #{tpu_custom_call.1} parent=11 // pred_fallthru
        _
      // Predicated region
      $region29: #{tpu_custom_call.1} parent=11 // pred_check
        %p224 = pneg %p171
      $region30: #{tpu_custom_call.1} parent=11 // pred_check_branch
        %226 = sbr.rel (%p224) target = $region32
      $region31: #{tpu_custom_call.1} parent=11 // pred_region
        _
      $region32: #{tpu_custom_call.1} parent=11 // pred_fallthru
        _
    $region12: #{tpu_custom_call.1} parent=5 // pred_fallthru
      _
    %p227 = scmp.lt.s32.totalorder %s14, 2
    // Predicated region
    $region33: #{tpu_custom_call.1} parent=5 // pred_check
      %p228 = pneg %p227
    $region34: #{tpu_custom_call.1} parent=5 // pred_check_branch
      %230 = sbr.rel (%p228) target = $region36
    $region35: #{tpu_custom_call.1} parent=5 // pred_region
      // Predicated region
      $region37: #{tpu_custom_call.1} parent=35 // pred_check
        %p231 = pneg %p34
      $region38: #{tpu_custom_call.1} parent=35 // pred_check_branch
        %233 = sbr.rel (%p231) target = $region40
      $region39: #{tpu_custom_call.1} parent=35 // pred_region
        %s234 = smul.u32 32, %s14
        %p235 = scmp.lt.s32.totalorder %s234, 63
        %s236 = scalar_select %p235, %s234, 63
        %s237 = smul.addr %s236, 8
        %s238 = scalar_lea.vmem %s0, %s237
        %s239 = smul.u32 32, %s14
      $region40: #{tpu_custom_call.1} parent=35 // pred_fallthru
        _
      // Predicated region
      $region41: #{tpu_custom_call.1} parent=35 // pred_check
        %p240 = pneg %p60
      $region42: #{tpu_custom_call.1} parent=35 // pred_check_branch
        %242 = sbr.rel (%p240) target = $region44
      $region43: #{tpu_custom_call.1} parent=35 // pred_region
        %s243 = smul.u32 32, %s14
        %p244 = scmp.lt.s32.totalorder %s243, 63
        %s245 = scalar_select %p244, %s243, 63
        %s246 = smul.addr %s245, 8
        %s247 = scalar_lea.vmem %s1, %s246
        %s248 = smul.u32 32, %s14
      $region44: #{tpu_custom_call.1} parent=35 // pred_fallthru
        _
    $region36: #{tpu_custom_call.1} parent=5 // pred_fallthru
      _
    %p249 = scmp.le.s32.totalorder 1, %s14
    %p250 = scmp.lt.s32.totalorder %s14, 3
    %p251 = pnand %p249, %p250
    %p252 = pneg %p251
    // Predicated region
    $region45: #{tpu_custom_call.1} parent=5 // pred_check
      _
    $region46: #{tpu_custom_call.1} parent=5 // pred_check_branch
      %254 = sbr.rel (%p251) target = $region48
    $region47: #{tpu_custom_call.1} parent=5 // pred_region
      %s255 = ssub.s32 %s14, 1
      %s256 = smul.u32 32, %s19
      %p257 = scmp.lt.s32.totalorder %s256, 63
      %s258 = scalar_select %p257, %s256, 63
      %s259 = smul.addr %s258, 8
      %s260 = scalar_lea.vmem %s0, %s259
      %p261 = pneg %p40
      %p262 = pneg %p37
      %s263 = smul.u32 32, %s19
      %p264 = scmp.lt.s32.totalorder %s263, 63
      %s265 = scalar_select %p264, %s263, 63
      %s266 = smul.addr %s265, 8
      %s267 = scalar_lea.vmem %s1, %s266
      %p268 = pneg %p66
      %p269 = pneg %p63
      %p270 = pneg %p87
      %p271 = pneg %p84
      %p272 = pneg %p108
      %p273 = pneg %p105
      %p274 = pneg %p129
      %p275 = pneg %p126
      %p276 = pneg %p150
      %p277 = pneg %p147
      %p278 = pneg %p171
      %p279 = pneg %p168
      %p280 = pneg %p197
      %p281 = pneg %p194
      %s282 = smul.u32 32, %s19
      %p283 = scmp.lt.s32.totalorder %s282, 63
      %s284 = scalar_select %p283, %s282, 63
      %s285 = smul.addr %s284, 8
      %s286 = scalar_lea.vmem %s7, %s285
      %s287 = smul.u32 32, %s19
      %p288 = scmp.lt.s32.totalorder %s287, 63
      %s289 = scalar_select %p288, %s287, 63
      %s290 = smul.addr %s289, 8
      %s291 = scalar_lea.vmem %s0, %s290
      %s292 = smul.u32 32, %s19
      %s293 = smul.u32 32, %s19
      %p294 = scmp.lt.s32.totalorder %s293, 63
      %s295 = scalar_select %p294, %s293, 63
      %s296 = smul.addr %s295, 8
      %s297 = scalar_lea.vmem %s1, %s296
      %s298 = smul.u32 32, %s19
      %s299 = smul.u32 32, %s19
      %p300 = scmp.lt.s32.totalorder %s299, 63
      %s301 = scalar_select %p300, %s299, 63
      %s302 = smul.addr %s301, 8
      %s303 = scalar_lea.vmem %s7, %s302
      %s304 = smul.u32 32, %s19
      %v305 = vld [vmem:[%s291] sm:$0xff]
      %v306 = vld [vmem:[%s291 + $0x8] sm:$0xff]
      %v307 = vld [vmem:[%s291 + $0x10] sm:$0xff]
      %v308 = vld [vmem:[%s291 + $0x18] sm:$0xff]
      %v309 = vld [vmem:[%s291 + $0x20] sm:$0xff]
      %v310 = vld [vmem:[%s291 + $0x28] sm:$0xff]
      %v311 = vld [vmem:[%s291 + $0x30] sm:$0xff]
      %v312 = vld [vmem:[%s291 + $0x38] sm:$0xff]
      %v313 = vld [vmem:[%s291 + $0x40] sm:$0xff]
      %v314 = vld [vmem:[%s291 + $0x48] sm:$0xff]
      %v315 = vld [vmem:[%s291 + $0x50] sm:$0xff]
      %v316 = vld [vmem:[%s291 + $0x58] sm:$0xff]
      %v317 = vld [vmem:[%s291 + $0x60] sm:$0xff]
      %v318 = vld [vmem:[%s291 + $0x68] sm:$0xff]
      %v319 = vld [vmem:[%s291 + $0x70] sm:$0xff]
      %v320 = vld [vmem:[%s291 + $0x78] sm:$0xff]
      %v321 = vld [vmem:[%s291 + $0x80] sm:$0xff]
      %v322 = vld [vmem:[%s291 + $0x88] sm:$0xff]
      %v323 = vld [vmem:[%s291 + $0x90] sm:$0xff]
      %v324 = vld [vmem:[%s291 + $0x98] sm:$0xff]
      %v325 = vld [vmem:[%s291 + $0xa0] sm:$0xff]
      %v326 = vld [vmem:[%s291 + $0xa8] sm:$0xff]
      %v327 = vld [vmem:[%s291 + $0xb0] sm:$0xff]
      %v328 = vld [vmem:[%s291 + $0xb8] sm:$0xff]
      %v329 = vld [vmem:[%s291 + $0xc0] sm:$0xff]
      %v330 = vld [vmem:[%s291 + $0xc8] sm:$0xff]
      %v331 = vld [vmem:[%s291 + $0xd0] sm:$0xff]
      %v332 = vld [vmem:[%s291 + $0xd8] sm:$0xff]
      %v333 = vld [vmem:[%s291 + $0xe0] sm:$0xff]
      %v334 = vld [vmem:[%s291 + $0xe8] sm:$0xff]
      %v335 = vld [vmem:[%s291 + $0xf0] sm:$0xff]
      %v336 = vld [vmem:[%s291 + $0xf8] sm:$0xff]
      %v337 = vld [vmem:[%s2] sm:$0xf]
      %v338 = vld [vmem:[%s297] sm:$0xff]
      %v339 = vld [vmem:[%s297 + $0x8] sm:$0xff]
      %v340 = vld [vmem:[%s297 + $0x10] sm:$0xff]
      %v341 = vld [vmem:[%s297 + $0x18] sm:$0xff]
      %v342 = vld [vmem:[%s297 + $0x20] sm:$0xff]
      %v343 = vld [vmem:[%s297 + $0x28] sm:$0xff]
      %v344 = vld [vmem:[%s297 + $0x30] sm:$0xff]
      %v345 = vld [vmem:[%s297 + $0x38] sm:$0xff]
      %v346 = vld [vmem:[%s297 + $0x40] sm:$0xff]
      %v347 = vld [vmem:[%s297 + $0x48] sm:$0xff]
      %v348 = vld [vmem:[%s297 + $0x50] sm:$0xff]
      %v349 = vld [vmem:[%s297 + $0x58] sm:$0xff]
      %v350 = vld [vmem:[%s297 + $0x60] sm:$0xff]
      %v351 = vld [vmem:[%s297 + $0x68] sm:$0xff]
      %v352 = vld [vmem:[%s297 + $0x70] sm:$0xff]
      %v353 = vld [vmem:[%s297 + $0x78] sm:$0xff]
      %v354 = vld [vmem:[%s297 + $0x80] sm:$0xff]
      %v355 = vld [vmem:[%s297 + $0x88] sm:$0xff]
      %v356 = vld [vmem:[%s297 + $0x90] sm:$0xff]
      %v357 = vld [vmem:[%s297 + $0x98] sm:$0xff]
      %v358 = vld [vmem:[%s297 + $0xa0] sm:$0xff]
      %v359 = vld [vmem:[%s297 + $0xa8] sm:$0xff]
      %v360 = vld [vmem:[%s297 + $0xb0] sm:$0xff]
      %v361 = vld [vmem:[%s297 + $0xb8] sm:$0xff]
      %v362 = vld [vmem:[%s297 + $0xc0] sm:$0xff]
      %v363 = vld [vmem:[%s297 + $0xc8] sm:$0xff]
      %v364 = vld [vmem:[%s297 + $0xd0] sm:$0xff]
      %v365 = vld [vmem:[%s297 + $0xd8] sm:$0xff]
      %v366 = vld [vmem:[%s297 + $0xe0] sm:$0xff]
      %v367 = vld [vmem:[%s297 + $0xe8] sm:$0xff]
      %v368 = vld [vmem:[%s297 + $0xf0] sm:$0xff]
      %v369 = vld [vmem:[%s297 + $0xf8] sm:$0xff]
      %v370 = vld [vmem:[%s3] sm:$0xf]
      %vm371 = vcmask 31744
      %v373 = vsel %vm371, %v338, 0
      %v376 = vsel %vm371, %v339, 0
      %v379 = vsel %vm371, %v340, 0
      %v382 = vsel %vm371, %v341, 0
      %v385 = vsel %vm371, %v342, 0
      %v388 = vsel %vm371, %v343, 0
      %v391 = vsel %vm371, %v344, 0
      %v394 = vsel %vm371, %v345, 0
      %v397 = vsel %vm371, %v346, 0
      %v400 = vsel %vm371, %v347, 0
      %v403 = vsel %vm371, %v348, 0
      %v406 = vsel %vm371, %v349, 0
      %v409 = vsel %vm371, %v350, 0
      %v412 = vsel %vm371, %v351, 0
      %v415 = vsel %vm371, %v352, 0
      %v418 = vsel %vm371, %v353, 0
      %v421 = vsel %vm371, %v354, 0
      %v424 = vsel %vm371, %v355, 0
      %v427 = vsel %vm371, %v356, 0
      %v430 = vsel %vm371, %v357, 0
      %v433 = vsel %vm371, %v358, 0
      %v436 = vsel %vm371, %v359, 0
      %v439 = vsel %vm371, %v360, 0
      %v442 = vsel %vm371, %v361, 0
      %v445 = vsel %vm371, %v362, 0
      %v448 = vsel %vm371, %v363, 0
      %v451 = vsel %vm371, %v364, 0
      %v454 = vsel %vm371, %v365, 0
      %v457 = vsel %vm371, %v366, 0
      %v460 = vsel %vm371, %v367, 0
      %v463 = vsel %vm371, %v368, 0
      %v466 = vsel %vm371, %v369, 0
      %vm468 = vcmask 1043456
      %v470 = vsel %vm468, %v370, 0
      %472 = vmatprep.subr.mxu0 0.0
      %473 = vmatpush1.msra.mxu0 %v470
      %474 = vmatprep.subr.mxu0 0.0
      %475 = vmatpush1.msra.mxu0 0.0
      %476 = vmatprep.subr.mxu0 0.0
      %477 = vmatpush1.msra.mxu0 0.0
      %478 = vmatprep.subr.mxu0 0.0
      %479 = vmatpush1.msra.mxu0 0.0
      %480 = vmatprep.subr.mxu0 0.0
      %481 = vmatpush1.msra.mxu0 0.0
      %482 = vmatprep.subr.mxu0 0.0
      %483 = vmatpush1.msra.mxu0 0.0
      %484 = vmatprep.subr.mxu0 0.0
      %485 = vmatpush1.msra.mxu0 0.0
      %486 = vmatprep.subr.mxu0 0.0
      %487 = vmatpush1.msra.mxu0 0.0
      %488 = vmatprep.subr.mxu0 0.0
      %489 = vmatpush1.msra.mxu0 0.0
      %490 = vmatprep.subr.mxu0 0.0
      %491 = vmatpush1.msra.mxu0 0.0
      %492 = vmatprep.subr.mxu0 0.0
      %493 = vmatpush1.msra.mxu0 0.0
      %494 = vmatprep.subr.mxu0 0.0
      %495 = vmatpush1.msra.mxu0 0.0
      %496 = vmatprep.subr.mxu0 0.0
      %497 = vmatpush1.msra.mxu0 0.0
      %498 = vmatprep.subr.mxu0 0.0
      %499 = vmatpush1.msra.mxu0 0.0
      %500 = vmatprep.subr.mxu0 0.0
      %501 = vmatpush1.msra.mxu0 0.0
      %502 = vmatprep.subr.mxu0 0.0
      %503 = vmatpush1.msra.mxu0 0.0
      %504 = vmatprep.subr.mxu0 0.0
      %505 = vmatpush1.msra.mxu0 0.0
      %506 = vmatprep.subr.mxu0 0.0
      %507 = vmatpush1.msra.mxu0 0.0
      %508 = vmatprep.subr.mxu0 0.0
      %509 = vmatpush1.msra.mxu0 0.0
      %510 = vmatprep.subr.mxu0 0.0
      %511 = vmatpush1.msra.mxu0 0.0
      %512 = vmatprep.subr.mxu0 0.0
      %513 = vmatpush1.msra.mxu0 0.0
      %514 = vmatprep.subr.mxu0 0.0
      %515 = vmatpush1.msra.mxu0 0.0
      %516 = vmatprep.subr.mxu0 0.0
      %517 = vmatpush1.msra.mxu0 0.0
      %518 = vmatprep.subr.mxu0 0.0
      %519 = vmatpush1.msra.mxu0 0.0
      %520 = vmatprep.subr.mxu0 0.0
      %521 = vmatpush1.msra.mxu0 0.0
      %522 = vmatprep.subr.mxu0 0.0
      %523 = vmatpush1.msra.mxu0 0.0
      %524 = vmatprep.subr.mxu0 0.0
      %525 = vmatpush1.msra.mxu0 0.0
      %526 = vmatprep.subr.mxu0 0.0
      %527 = vmatpush1.msra.mxu0 0.0
      %528 = vmatprep.subr.mxu0 0.0
      %529 = vmatpush1.msra.mxu0 0.0
      %530 = vmatprep.subr.mxu0 0.0
      %531 = vmatpush1.msra.mxu0 0.0
      %532 = vmatprep.subr.mxu0 0.0
      %533 = vmatpush1.msra.mxu0 0.0
      %534 = vmatprep.subr.mxu0 0.0
      %535 = vmatpush1.msra.mxu0 0.0
      %536 = vmatprep.mubr.f32.mxu0 0.0
      %537 = vmatmul.mubr.f32.gmra.mrb[0].mxu0 %v373
      %v538 = vpop.f32.mrb[0].mxu0
      %v539 = vadd.f32 0.0, %v538
      %v540 = vpop.f32.mrb[0].mxu0
      %541 = vmatprep.mubr.f32.mxu0 0.0
      %542 = vmatmul.mubr.f32.gmra.mrb[0].mxu0 %v376
      %v543 = vpop.f32.mrb[0].mxu0
      %v544 = vadd.f32 0.0, %v543
      %v545 = vpop.f32.mrb[0].mxu0
      %546 = vmatprep.mubr.f32.mxu0 0.0
      %547 = vmatmul.mubr.f32.gmra.mrb[0].mxu0 %v379
      %v548 = vpop.f32.mrb[0].mxu0
      %v549 = vadd.f32 0.0, %v548
      %v550 = vpop.f32.mrb[0].mxu0
      %551 = vmatprep.mubr.f32.mxu0 0.0
      %552 = vmatmul.mubr.f32.gmra.mrb[0].mxu0 %v382
      %v553 = vpop.f32.mrb[0].mxu0
      %v554 = vadd.f32 0.0, %v553
      %v555 = vpop.f32.mrb[0].mxu0
      %556 = vmatprep.mubr.f32.mxu0 0.0
      %557 = vmatmul.mubr.f32.gmra.mrb[0].mxu0 %v385
      %v558 = vpop.f32.mrb[0].mxu0
      %v559 = vadd.f32 0.0, %v558
      %v560 = vpop.f32.mrb[0].mxu0
      %561 = vmatprep.mubr.f32.mxu0 0.0
      %562 = vmatmul.mubr.f32.gmra.mrb[0].mxu0 %v388
      %v563 = vpop.f32.mrb[0].mxu0
      %v564 = vadd.f32 0.0, %v563
      %v565 = vpop.f32.mrb[0].mxu0
      %566 = vmatprep.mubr.f32.mxu0 0.0
      %567 = vmatmul.mubr.f32.gmra.mrb[0].mxu0 %v391
      %v568 = vpop.f32.mrb[0].mxu0
      %v569 = vadd.f32 0.0, %v568
      %v570 = vpop.f32.mrb[0].mxu0
      %571 = vmatprep.mubr.f32.mxu0 0.0
      %572 = vmatmul.mubr.f32.gmra.mrb[0].mxu0 %v394
      %v573 = vpop.f32.mrb[0].mxu0
      %v574 = vadd.f32 0.0, %v573
      %v575 = vpop.f32.mrb[0].mxu0
      %576 = vmatprep.mubr.f32.mxu0 0.0
      %577 = vmatmul.mubr.f32.gmra.mrb[0].mxu0 %v397
      %v578 = vpop.f32.mrb[0].mxu0
      %v579 = vadd.f32 0.0, %v578
      %v580 = vpop.f32.mrb[0].mxu0
      %581 = vmatprep.mubr.f32.mxu0 0.0
      %582 = vmatmul.mubr.f32.gmra.mrb[0].mxu0 %v400
      %v583 = vpop.f32.mrb[0].mxu0
      %v584 = vadd.f32 0.0, %v583
      %v585 = vpop.f32.mrb[0].mxu0
      %586 = vmatprep.mubr.f32.mxu0 0.0
      %587 = vmatmul.mubr.f32.gmra.mrb[0].mxu0 %v403
      %v588 = vpop.f32.mrb[0].mxu0
      %v589 = vadd.f32 0.0, %v588
      %v590 = vpop.f32.mrb[0].mxu0
      %591 = vmatprep.mubr.f32.mxu0 0.0
      %592 = vmatmul.mubr.f32.gmra.mrb[0].mxu0 %v406
      %v593 = vpop.f32.mrb[0].mxu0
      %v594 = vadd.f32 0.0, %v593
      %v595 = vpop.f32.mrb[0].mxu0
      %596 = vmatprep.mubr.f32.mxu0 0.0
      %597 = vmatmul.mubr.f32.gmra.mrb[0].mxu0 %v409
      %v598 = vpop.f32.mrb[0].mxu0
      %v599 = vadd.f32 0.0, %v598
      %v600 = vpop.f32.mrb[0].mxu0
      %601 = vmatprep.mubr.f32.mxu0 0.0
      %602 = vmatmul.mubr.f32.gmra.mrb[0].mxu0 %v412
      %v603 = vpop.f32.mrb[0].mxu0
      %v604 = vadd.f32 0.0, %v603
      %v605 = vpop.f32.mrb[0].mxu0
      %606 = vmatprep.mubr.f32.mxu0 0.0
      %607 = vmatmul.mubr.f32.gmra.mrb[0].mxu0 %v415
      %v608 = vpop.f32.mrb[0].mxu0
      %v609 = vadd.f32 0.0, %v608
      %v610 = vpop.f32.mrb[0].mxu0
      %611 = vmatprep.mubr.f32.mxu0 0.0
      %612 = vmatmul.mubr.f32.gmra.mrb[0].mxu0 %v418
      %v613 = vpop.f32.mrb[0].mxu0
      %v614 = vadd.f32 0.0, %v613
      %v615 = vpop.f32.mrb[0].mxu0
      %616 = vmatprep.mubr.f32.mxu0 0.0
      %617 = vmatmul.mubr.f32.gmra.mrb[0].mxu0 %v421
      %v618 = vpop.f32.mrb[0].mxu0
      %v619 = vadd.f32 0.0, %v618
      %v620 = vpop.f32.mrb[0].mxu0
      %621 = vmatprep.mubr.f32.mxu0 0.0
      %622 = vmatmul.mubr.f32.gmra.mrb[0].mxu0 %v424
      %v623 = vpop.f32.mrb[0].mxu0
      %v624 = vadd.f32 0.0, %v623
      %v625 = vpop.f32.mrb[0].mxu0
      %626 = vmatprep.mubr.f32.mxu0 0.0
      %627 = vmatmul.mubr.f32.gmra.mrb[0].mxu0 %v427
      %v628 = vpop.f32.mrb[0].mxu0
      %v629 = vadd.f32 0.0, %v628
      %v630 = vpop.f32.mrb[0].mxu0
      %631 = vmatprep.mubr.f32.mxu0 0.0
      %632 = vmatmul.mubr.f32.gmra.mrb[0].mxu0 %v430
      %v633 = vpop.f32.mrb[0].mxu0
      %v634 = vadd.f32 0.0, %v633
      %v635 = vpop.f32.mrb[0].mxu0
      %636 = vmatprep.mubr.f32.mxu0 0.0
      %637 = vmatmul.mubr.f32.gmra.mrb[0].mxu0 %v433
      %v638 = vpop.f32.mrb[0].mxu0
      %v639 = vadd.f32 0.0, %v638
      %v640 = vpop.f32.mrb[0].mxu0
      %641 = vmatprep.mubr.f32.mxu0 0.0
      %642 = vmatmul.mubr.f32.gmra.mrb[0].mxu0 %v436
      %v643 = vpop.f32.mrb[0].mxu0
      %v644 = vadd.f32 0.0, %v643
      %v645 = vpop.f32.mrb[0].mxu0
      %646 = vmatprep.mubr.f32.mxu0 0.0
      %647 = vmatmul.mubr.f32.gmra.mrb[0].mxu0 %v439
      %v648 = vpop.f32.mrb[0].mxu0
      %v649 = vadd.f32 0.0, %v648
      %v650 = vpop.f32.mrb[0].mxu0
      %651 = vmatprep.mubr.f32.mxu0 0.0
      %652 = vmatmul.mubr.f32.gmra.mrb[0].mxu0 %v442
      %v653 = vpop.f32.mrb[0].mxu0
      %v654 = vadd.f32 0.0, %v653
      %v655 = vpop.f32.mrb[0].mxu0
      %656 = vmatprep.mubr.f32.mxu0 0.0
      %657 = vmatmul.mubr.f32.gmra.mrb[0].mxu0 %v445
      %v658 = vpop.f32.mrb[0].mxu0
      %v659 = vadd.f32 0.0, %v658
      %v660 = vpop.f32.mrb[0].mxu0
      %661 = vmatprep.mubr.f32.mxu0 0.0
      %662 = vmatmul.mubr.f32.gmra.mrb[0].mxu0 %v448
      %v663 = vpop.f32.mrb[0].mxu0
      %v664 = vadd.f32 0.0, %v663
      %v665 = vpop.f32.mrb[0].mxu0
      %666 = vmatprep.mubr.f32.mxu0 0.0
      %667 = vmatmul.mubr.f32.gmra.mrb[0].mxu0 %v451
      %v668 = vpop.f32.mrb[0].mxu0
      %v669 = vadd.f32 0.0, %v668
      %v670 = vpop.f32.mrb[0].mxu0
      %671 = vmatprep.mubr.f32.mxu0 0.0
      %672 = vmatmul.mubr.f32.gmra.mrb[0].mxu0 %v454
      %v673 = vpop.f32.mrb[0].mxu0
      %v674 = vadd.f32 0.0, %v673
      %v675 = vpop.f32.mrb[0].mxu0
      %676 = vmatprep.mubr.f32.mxu0 0.0
      %677 = vmatmul.mubr.f32.gmra.mrb[0].mxu0 %v457
      %v678 = vpop.f32.mrb[0].mxu0
      %v679 = vadd.f32 0.0, %v678
      %v680 = vpop.f32.mrb[0].mxu0
      %681 = vmatprep.mubr.f32.mxu0 0.0
      %682 = vmatmul.mubr.f32.gmra.mrb[0].mxu0 %v460
      %v683 = vpop.f32.mrb[0].mxu0
      %v684 = vadd.f32 0.0, %v683
      %v685 = vpop.f32.mrb[0].mxu0
      %686 = vmatprep.mubr.f32.mxu0 0.0
      %687 = vmatmul.mubr.f32.gmra.mrb[0].mxu0 %v463
      %v688 = vpop.f32.mrb[0].mxu0
      %v689 = vadd.f32 0.0, %v688
      %v690 = vpop.f32.mrb[0].mxu0
      %691 = vmatprep.mubr.f32.mxu0 0.0
      %692 = vmatmul.mubr.f32.gmra.mrb[0].mxu0 %v466
      %v693 = vpop.f32.mrb[0].mxu0
      %v694 = vadd.f32 0.0, %v693
      %v695 = vpop.f32.mrb[0].mxu0
      %696 = vdwg.mxu0
      %v698 = vsel %vm371, %v305, 0
      %v701 = vsel %vm371, %v306, 0
      %v704 = vsel %vm371, %v307, 0
      %v707 = vsel %vm371, %v308, 0
      %v710 = vsel %vm371, %v309, 0
      %v713 = vsel %vm371, %v310, 0
      %v716 = vsel %vm371, %v311, 0
      %v719 = vsel %vm371, %v312, 0
      %v722 = vsel %vm371, %v313, 0
      %v725 = vsel %vm371, %v314, 0
      %v728 = vsel %vm371, %v315, 0
      %v731 = vsel %vm371, %v316, 0
      %v734 = vsel %vm371, %v317, 0
      %v737 = vsel %vm371, %v318, 0
      %v740 = vsel %vm371, %v319, 0
      %v743 = vsel %vm371, %v320, 0
      %v746 = vsel %vm371, %v321, 0
      %v749 = vsel %vm371, %v322, 0
      %v752 = vsel %vm371, %v323, 0
      %v755 = vsel %vm371, %v324, 0
      %v758 = vsel %vm371, %v325, 0
      %v761 = vsel %vm371, %v326, 0
      %v764 = vsel %vm371, %v327, 0
      %v767 = vsel %vm371, %v328, 0
      %v770 = vsel %vm371, %v329, 0
      %v773 = vsel %vm371, %v330, 0
      %v776 = vsel %vm371, %v331, 0
      %v779 = vsel %vm371, %v332, 0
      %v782 = vsel %vm371, %v333, 0
      %v785 = vsel %vm371, %v334, 0
      %v788 = vsel %vm371, %v335, 0
      %v791 = vsel %vm371, %v336, 0
      %v794 = vsel %vm468, %v337, 0
      %796 = vmatprep.subr.mxu0 0.0
      %797 = vmatpush1.msra.mxu0 %v794
      %798 = vmatprep.subr.mxu0 0.0
      %799 = vmatpush1.msra.mxu0 0.0
      %800 = vmatprep.subr.mxu0 0.0
      %801 = vmatpush1.msra.mxu0 0.0
      %802 = vmatprep.subr.mxu0 0.0
      %803 = vmatpush1.msra.mxu0 0.0
      %804 = vmatprep.subr.mxu0 0.0
      %805 = vmatpush1.msra.mxu0 0.0
      %806 = vmatprep.subr.mxu0 0.0
      %807 = vmatpush1.msra.mxu0 0.0
      %808 = vmatprep.subr.mxu0 0.0
      %809 = vmatpush1.msra.mxu0 0.0
      %810 = vmatprep.subr.mxu0 0.0
      %811 = vmatpush1.msra.mxu0 0.0
      %812 = vmatprep.subr.mxu0 0.0
      %813 = vmatpush1.msra.mxu0 0.0
      %814 = vmatprep.subr.mxu0 0.0
      %815 = vmatpush1.msra.mxu0 0.0
      %816 = vmatprep.subr.mxu0 0.0
      %817 = vmatpush1.msra.mxu0 0.0
      %818 = vmatprep.subr.mxu0 0.0
      %819 = vmatpush1.msra.mxu0 0.0
      %820 = vmatprep.subr.mxu0 0.0
      %821 = vmatpush1.msra.mxu0 0.0
      %822 = vmatprep.subr.mxu0 0.0
      %823 = vmatpush1.msra.mxu0 0.0
      %824 = vmatprep.subr.mxu0 0.0
      %825 = vmatpush1.msra.mxu0 0.0
      %826 = vmatprep.subr.mxu0 0.0
      %827 = vmatpush1.msra.mxu0 0.0
      %828 = vmatprep.subr.mxu0 0.0
      %829 = vmatpush1.msra.mxu0 0.0
      %830 = vmatprep.subr.mxu0 0.0
      %831 = vmatpush1.msra.mxu0 0.0
      %832 = vmatprep.subr.mxu0 0.0
      %833 = vmatpush1.msra.mxu0 0.0
      %834 = vmatprep.subr.mxu0 0.0
      %835 = vmatpush1.msra.mxu0 0.0
      %836 = vmatprep.subr.mxu0 0.0
      %837 = vmatpush1.msra.mxu0 0.0
      %838 = vmatprep.subr.mxu0 0.0
      %839 = vmatpush1.msra.mxu0 0.0
      %840 = vmatprep.subr.mxu0 0.0
      %841 = vmatpush1.msra.mxu0 0.0
      %842 = vmatprep.subr.mxu0 0.0
      %843 = vmatpush1.msra.mxu0 0.0
      %844 = vmatprep.subr.mxu0 0.0
      %845 = vmatpush1.msra.mxu0 0.0
      %846 = vmatprep.subr.mxu0 0.0
      %847 = vmatpush1.msra.mxu0 0.0
      %848 = vmatprep.subr.mxu0 0.0
      %849 = vmatpush1.msra.mxu0 0.0
      %850 = vmatprep.subr.mxu0 0.0
      %851 = vmatpush1.msra.mxu0 0.0
      %852 = vmatprep.subr.mxu0 0.0
      %853 = vmatpush1.msra.mxu0 0.0
      %854 = vmatprep.subr.mxu0 0.0
      %855 = vmatpush1.msra.mxu0 0.0
      %856 = vmatprep.subr.mxu0 0.0
      %857 = vmatpush1.msra.mxu0 0.0
      %858 = vmatprep.subr.mxu0 0.0
      %859 = vmatpush1.msra.mxu0 0.0
      %860 = vmatprep.mubr.f32.mxu0 0.0
      %861 = vmatmul.mubr.f32.gmra.mrb[0].mxu0 %v698
      %v862 = vpop.f32.mrb[0].mxu0
      %v863 = vadd.f32 %v539, %v862
      %v864 = vpop.f32.mrb[0].mxu0
      %865 = vmatprep.mubr.f32.mxu0 0.0
      %866 = vmatmul.mubr.f32.gmra.mrb[0].mxu0 %v701
      %v867 = vpop.f32.mrb[0].mxu0
      %v868 = vadd.f32 %v544, %v867
      %v869 = vpop.f32.mrb[0].mxu0
      %870 = vmatprep.mubr.f32.mxu0 0.0
      %871 = vmatmul.mubr.f32.gmra.mrb[0].mxu0 %v704
      %v872 = vpop.f32.mrb[0].mxu0
      %v873 = vadd.f32 %v549, %v872
      %v874 = vpop.f32.mrb[0].mxu0
      %875 = vmatprep.mubr.f32.mxu0 0.0
      %876 = vmatmul.mubr.f32.gmra.mrb[0].mxu0 %v707
      %v877 = vpop.f32.mrb[0].mxu0
      %v878 = vadd.f32 %v554, %v877
      %v879 = vpop.f32.mrb[0].mxu0
      %880 = vmatprep.mubr.f32.mxu0 0.0
      %881 = vmatmul.mubr.f32.gmra.mrb[0].mxu0 %v710
      %v882 = vpop.f32.mrb[0].mxu0
      %v883 = vadd.f32 %v559, %v882
      %v884 = vpop.f32.mrb[0].mxu0
      %885 = vmatprep.mubr.f32.mxu0 0.0
      %886 = vmatmul.mubr.f32.gmra.mrb[0].mxu0 %v713
      %v887 = vpop.f32.mrb[0].mxu0
      %v888 = vadd.f32 %v564, %v887
      %v889 = vpop.f32.mrb[0].mxu0
      %890 = vmatprep.mubr.f32.mxu0 0.0
      %891 = vmatmul.mubr.f32.gmra.mrb[0].mxu0 %v716
      %v892 = vpop.f32.mrb[0].mxu0
      %v893 = vadd.f32 %v569, %v892
      %v894 = vpop.f32.mrb[0].mxu0
      %895 = vmatprep.mubr.f32.mxu0 0.0
      %896 = vmatmul.mubr.f32.gmra.mrb[0].mxu0 %v719
      %v897 = vpop.f32.mrb[0].mxu0
      %v898 = vadd.f32 %v574, %v897
      %v899 = vpop.f32.mrb[0].mxu0
      %900 = vmatprep.mubr.f32.mxu0 0.0
      %901 = vmatmul.mubr.f32.gmra.mrb[0].mxu0 %v722
      %v902 = vpop.f32.mrb[0].mxu0
      %v903 = vadd.f32 %v579, %v902
      %v904 = vpop.f32.mrb[0].mxu0
      %905 = vmatprep.mubr.f32.mxu0 0.0
      %906 = vmatmul.mubr.f32.gmra.mrb[0].mxu0 %v725
      %v907 = vpop.f32.mrb[0].mxu0
      %v908 = vadd.f32 %v584, %v907
      %v909 = vpop.f32.mrb[0].mxu0
      %910 = vmatprep.mubr.f32.mxu0 0.0
      %911 = vmatmul.mubr.f32.gmra.mrb[0].mxu0 %v728
      %v912 = vpop.f32.mrb[0].mxu0
      %v913 = vadd.f32 %v589, %v912
      %v914 = vpop.f32.mrb[0].mxu0
      %915 = vmatprep.mubr.f32.mxu0 0.0
      %916 = vmatmul.mubr.f32.gmra.mrb[0].mxu0 %v731
      %v917 = vpop.f32.mrb[0].mxu0
      %v918 = vadd.f32 %v594, %v917
      %v919 = vpop.f32.mrb[0].mxu0
      %920 = vmatprep.mubr.f32.mxu0 0.0
      %921 = vmatmul.mubr.f32.gmra.mrb[0].mxu0 %v734
      %v922 = vpop.f32.mrb[0].mxu0
      %v923 = vadd.f32 %v599, %v922
      %v924 = vpop.f32.mrb[0].mxu0
      %925 = vmatprep.mubr.f32.mxu0 0.0
      %926 = vmatmul.mubr.f32.gmra.mrb[0].mxu0 %v737
      %v927 = vpop.f32.mrb[0].mxu0
      %v928 = vadd.f32 %v604, %v927
      %v929 = vpop.f32.mrb[0].mxu0
      %930 = vmatprep.mubr.f32.mxu0 0.0
      %931 = vmatmul.mubr.f32.gmra.mrb[0].mxu0 %v740
      %v932 = vpop.f32.mrb[0].mxu0
      %v933 = vadd.f32 %v609, %v932
      %v934 = vpop.f32.mrb[0].mxu0
      %935 = vmatprep.mubr.f32.mxu0 0.0
      %936 = vmatmul.mubr.f32.gmra.mrb[0].mxu0 %v743
      %v937 = vpop.f32.mrb[0].mxu0
      %v938 = vadd.f32 %v614, %v937
      %v939 = vpop.f32.mrb[0].mxu0
      %940 = vmatprep.mubr.f32.mxu0 0.0
      %941 = vmatmul.mubr.f32.gmra.mrb[0].mxu0 %v746
      %v942 = vpop.f32.mrb[0].mxu0
      %v943 = vadd.f32 %v619, %v942
      %v944 = vpop.f32.mrb[0].mxu0
      %945 = vmatprep.mubr.f32.mxu0 0.0
      %946 = vmatmul.mubr.f32.gmra.mrb[0].mxu0 %v749
      %v947 = vpop.f32.mrb[0].mxu0
      %v948 = vadd.f32 %v624, %v947
      %v949 = vpop.f32.mrb[0].mxu0
      %950 = vmatprep.mubr.f32.mxu0 0.0
      %951 = vmatmul.mubr.f32.gmra.mrb[0].mxu0 %v752
      %v952 = vpop.f32.mrb[0].mxu0
      %v953 = vadd.f32 %v629, %v952
      %v954 = vpop.f32.mrb[0].mxu0
      %955 = vmatprep.mubr.f32.mxu0 0.0
      %956 = vmatmul.mubr.f32.gmra.mrb[0].mxu0 %v755
      %v957 = vpop.f32.mrb[0].mxu0
      %v958 = vadd.f32 %v634, %v957
      %v959 = vpop.f32.mrb[0].mxu0
      %960 = vmatprep.mubr.f32.mxu0 0.0
      %961 = vmatmul.mubr.f32.gmra.mrb[0].mxu0 %v758
      %v962 = vpop.f32.mrb[0].mxu0
      %v963 = vadd.f32 %v639, %v962
      %v964 = vpop.f32.mrb[0].mxu0
      %965 = vmatprep.mubr.f32.mxu0 0.0
      %966 = vmatmul.mubr.f32.gmra.mrb[0].mxu0 %v761
      %v967 = vpop.f32.mrb[0].mxu0
      %v968 = vadd.f32 %v644, %v967
      %v969 = vpop.f32.mrb[0].mxu0
      %970 = vmatprep.mubr.f32.mxu0 0.0
      %971 = vmatmul.mubr.f32.gmra.mrb[0].mxu0 %v764
      %v972 = vpop.f32.mrb[0].mxu0
      %v973 = vadd.f32 %v649, %v972
      %v974 = vpop.f32.mrb[0].mxu0
      %975 = vmatprep.mubr.f32.mxu0 0.0
      %976 = vmatmul.mubr.f32.gmra.mrb[0].mxu0 %v767
      %v977 = vpop.f32.mrb[0].mxu0
      %v978 = vadd.f32 %v654, %v977
      %v979 = vpop.f32.mrb[0].mxu0
      %980 = vmatprep.mubr.f32.mxu0 0.0
      %981 = vmatmul.mubr.f32.gmra.mrb[0].mxu0 %v770
      %v982 = vpop.f32.mrb[0].mxu0
      %v983 = vadd.f32 %v659, %v982
      %v984 = vpop.f32.mrb[0].mxu0
      %985 = vmatprep.mubr.f32.mxu0 0.0
      %986 = vmatmul.mubr.f32.gmra.mrb[0].mxu0 %v773
      %v987 = vpop.f32.mrb[0].mxu0
      %v988 = vadd.f32 %v664, %v987
      %v989 = vpop.f32.mrb[0].mxu0
      %990 = vmatprep.mubr.f32.mxu0 0.0
      %991 = vmatmul.mubr.f32.gmra.mrb[0].mxu0 %v776
      %v992 = vpop.f32.mrb[0].mxu0
      %v993 = vadd.f32 %v669, %v992
      %v994 = vpop.f32.mrb[0].mxu0
      %995 = vmatprep.mubr.f32.mxu0 0.0
      %996 = vmatmul.mubr.f32.gmra.mrb[0].mxu0 %v779
      %v997 = vpop.f32.mrb[0].mxu0
      %v998 = vadd.f32 %v674, %v997
      %v999 = vpop.f32.mrb[0].mxu0
      %1000 = vmatprep.mubr.f32.mxu0 0.0
      %1001 = vmatmul.mubr.f32.gmra.mrb[0].mxu0 %v782
      %v1002 = vpop.f32.mrb[0].mxu0
      %v1003 = vadd.f32 %v679, %v1002
      %v1004 = vpop.f32.mrb[0].mxu0
      %1005 = vmatprep.mubr.f32.mxu0 0.0
      %1006 = vmatmul.mubr.f32.gmra.mrb[0].mxu0 %v785
      %v1007 = vpop.f32.mrb[0].mxu0
      %v1008 = vadd.f32 %v684, %v1007
      %v1009 = vpop.f32.mrb[0].mxu0
      %1010 = vmatprep.mubr.f32.mxu0 0.0
      %1011 = vmatmul.mubr.f32.gmra.mrb[0].mxu0 %v788
      %v1012 = vpop.f32.mrb[0].mxu0
      %v1013 = vadd.f32 %v689, %v1012
      %v1014 = vpop.f32.mrb[0].mxu0
      %1015 = vmatprep.mubr.f32.mxu0 0.0
      %1016 = vmatmul.mubr.f32.gmra.mrb[0].mxu0 %v791
      %v1017 = vpop.f32.mrb[0].mxu0
      %v1018 = vadd.f32 %v694, %v1017
      %v1019 = vpop.f32.mrb[0].mxu0
      %1020 = vdwg.mxu0
      %v1021 = vld [vmem:[%s5] sm:$0x1]
      %v1023 = vlaneseq
      %v1024 = vshrl.u32 %v1023, 7
      %v1025 = vsub.s32 0, %v1024
      %v1026 = vrot.slane %v1021, %v1025
      %v1028 = vadd.f32 %v863, %v1026
      %v1029 = vadd.f32 %v868, %v1026
      %v1030 = vadd.f32 %v873, %v1026
      %v1031 = vadd.f32 %v878, %v1026
      %v1032 = vadd.f32 %v883, %v1026
      %v1033 = vadd.f32 %v888, %v1026
      %v1034 = vadd.f32 %v893, %v1026
      %v1035 = vadd.f32 %v898, %v1026
      %v1036 = vadd.f32 %v903, %v1026
      %v1037 = vadd.f32 %v908, %v1026
      %v1038 = vadd.f32 %v913, %v1026
      %v1039 = vadd.f32 %v918, %v1026
      %v1040 = vadd.f32 %v923, %v1026
      %v1041 = vadd.f32 %v928, %v1026
      %v1042 = vadd.f32 %v933, %v1026
      %v1043 = vadd.f32 %v938, %v1026
      %v1044 = vadd.f32 %v943, %v1026
      %v1045 = vadd.f32 %v948, %v1026
      %v1046 = vadd.f32 %v953, %v1026
      %v1047 = vadd.f32 %v958, %v1026
      %v1048 = vadd.f32 %v963, %v1026
      %v1049 = vadd.f32 %v968, %v1026
      %v1050 = vadd.f32 %v973, %v1026
      %v1051 = vadd.f32 %v978, %v1026
      %v1052 = vadd.f32 %v983, %v1026
      %v1053 = vadd.f32 %v988, %v1026
      %v1054 = vadd.f32 %v993, %v1026
      %v1055 = vadd.f32 %v998, %v1026
      %v1056 = vadd.f32 %v1003, %v1026
      %v1057 = vadd.f32 %v1008, %v1026
      %v1058 = vadd.f32 %v1013, %v1026
      %v1059 = vadd.f32 %v1018, %v1026
      %v1060 = vmax.f32 %v1028, 0.0
      %v1061 = vmax.f32 %v1029, 0.0
      %v1062 = vmax.f32 %v1030, 0.0
      %v1063 = vmax.f32 %v1031, 0.0
      %v1064 = vmax.f32 %v1032, 0.0
      %v1065 = vmax.f32 %v1033, 0.0
      %v1066 = vmax.f32 %v1034, 0.0
      %v1067 = vmax.f32 %v1035, 0.0
      %v1068 = vmax.f32 %v1036, 0.0
      %v1069 = vmax.f32 %v1037, 0.0
      %v1070 = vmax.f32 %v1038, 0.0
      %v1071 = vmax.f32 %v1039, 0.0
      %v1072 = vmax.f32 %v1040, 0.0
      %v1073 = vmax.f32 %v1041, 0.0
      %v1074 = vmax.f32 %v1042, 0.0
      %v1075 = vmax.f32 %v1043, 0.0
      %v1076 = vmax.f32 %v1044, 0.0
      %v1077 = vmax.f32 %v1045, 0.0
      %v1078 = vmax.f32 %v1046, 0.0
      %v1079 = vmax.f32 %v1047, 0.0
      %v1080 = vmax.f32 %v1048, 0.0
      %v1081 = vmax.f32 %v1049, 0.0
      %v1082 = vmax.f32 %v1050, 0.0
      %v1083 = vmax.f32 %v1051, 0.0
      %v1084 = vmax.f32 %v1052, 0.0
      %v1085 = vmax.f32 %v1053, 0.0
      %v1086 = vmax.f32 %v1054, 0.0
      %v1087 = vmax.f32 %v1055, 0.0
      %v1088 = vmax.f32 %v1056, 0.0
      %v1089 = vmax.f32 %v1057, 0.0
      %v1090 = vmax.f32 %v1058, 0.0
      %v1091 = vmax.f32 %v1059, 0.0
      %v1092 = vld [vmem:[%s4] sm:$0x1]
      %v1094 = vlaneseq
      %v1095 = vshrl.u32 %v1094, 7
      %v1096 = vsub.s32 0, %v1095
      %v1097 = vrot.slane %v1092, %v1096
      %v1099 = vmul.f32 %v1060, %v1097
      %v1100 = vmul.f32 %v1061, %v1097
      %v1101 = vmul.f32 %v1062, %v1097
      %v1102 = vmul.f32 %v1063, %v1097
      %v1103 = vmul.f32 %v1064, %v1097
      %v1104 = vmul.f32 %v1065, %v1097
      %v1105 = vmul.f32 %v1066, %v1097
      %v1106 = vmul.f32 %v1067, %v1097
      %v1107 = vmul.f32 %v1068, %v1097
      %v1108 = vmul.f32 %v1069, %v1097
      %v1109 = vmul.f32 %v1070, %v1097
      %v1110 = vmul.f32 %v1071, %v1097
      %v1111 = vmul.f32 %v1072, %v1097
      %v1112 = vmul.f32 %v1073, %v1097
      %v1113 = vmul.f32 %v1074, %v1097
      %v1114 = vmul.f32 %v1075, %v1097
      %v1115 = vmul.f32 %v1076, %v1097
      %v1116 = vmul.f32 %v1077, %v1097
      %v1117 = vmul.f32 %v1078, %v1097
      %v1118 = vmul.f32 %v1079, %v1097
      %v1119 = vmul.f32 %v1080, %v1097
      %v1120 = vmul.f32 %v1081, %v1097
      %v1121 = vmul.f32 %v1082, %v1097
      %v1122 = vmul.f32 %v1083, %v1097
      %v1123 = vmul.f32 %v1084, %v1097
      %v1124 = vmul.f32 %v1085, %v1097
      %v1125 = vmul.f32 %v1086, %v1097
      %v1126 = vmul.f32 %v1087, %v1097
      %v1127 = vmul.f32 %v1088, %v1097
      %v1128 = vmul.f32 %v1089, %v1097
      %v1129 = vmul.f32 %v1090, %v1097
      %v1130 = vmul.f32 %v1091, %v1097
      %1131 = vadd.xlane.f32.xlu0 %v1099
      %v1132 = vpop.xlane.xlu0 %1131
      %1133 = vadd.xlane.f32.xlu0 %v1100
      %v1134 = vpop.xlane.xlu0 %1133
      %1135 = vadd.xlane.f32.xlu0 %v1101
      %v1136 = vpop.xlane.xlu0 %1135
      %1137 = vadd.xlane.f32.xlu0 %v1102
      %v1138 = vpop.xlane.xlu0 %1137
      %1139 = vadd.xlane.f32.xlu0 %v1103
      %v1140 = vpop.xlane.xlu0 %1139
      %1141 = vadd.xlane.f32.xlu0 %v1104
      %v1142 = vpop.xlane.xlu0 %1141
      %1143 = vadd.xlane.f32.xlu0 %v1105
      %v1144 = vpop.xlane.xlu0 %1143
      %1145 = vadd.xlane.f32.xlu0 %v1106
      %v1146 = vpop.xlane.xlu0 %1145
      %1147 = vadd.xlane.f32.xlu0 %v1107
      %v1148 = vpop.xlane.xlu0 %1147
      %1149 = vadd.xlane.f32.xlu0 %v1108
      %v1150 = vpop.xlane.xlu0 %1149
      %1151 = vadd.xlane.f32.xlu0 %v1109
      %v1152 = vpop.xlane.xlu0 %1151
      %1153 = vadd.xlane.f32.xlu0 %v1110
      %v1154 = vpop.xlane.xlu0 %1153
      %1155 = vadd.xlane.f32.xlu0 %v1111
      %v1156 = vpop.xlane.xlu0 %1155
      %1157 = vadd.xlane.f32.xlu0 %v1112
      %v1158 = vpop.xlane.xlu0 %1157
      %1159 = vadd.xlane.f32.xlu0 %v1113
      %v1160 = vpop.xlane.xlu0 %1159
      %1161 = vadd.xlane.f32.xlu0 %v1114
      %v1162 = vpop.xlane.xlu0 %1161
      %1163 = vadd.xlane.f32.xlu0 %v1115
      %v1164 = vpop.xlane.xlu0 %1163
      %1165 = vadd.xlane.f32.xlu0 %v1116
      %v1166 = vpop.xlane.xlu0 %1165
      %1167 = vadd.xlane.f32.xlu0 %v1117
      %v1168 = vpop.xlane.xlu0 %1167
      %1169 = vadd.xlane.f32.xlu0 %v1118
      %v1170 = vpop.xlane.xlu0 %1169
      %1171 = vadd.xlane.f32.xlu0 %v1119
      %v1172 = vpop.xlane.xlu0 %1171
      %1173 = vadd.xlane.f32.xlu0 %v1120
      %v1174 = vpop.xlane.xlu0 %1173
      %1175 = vadd.xlane.f32.xlu0 %v1121
      %v1176 = vpop.xlane.xlu0 %1175
      %1177 = vadd.xlane.f32.xlu0 %v1122
      %v1178 = vpop.xlane.xlu0 %1177
      %1179 = vadd.xlane.f32.xlu0 %v1123
      %v1180 = vpop.xlane.xlu0 %1179
      %1181 = vadd.xlane.f32.xlu0 %v1124
      %v1182 = vpop.xlane.xlu0 %1181
      %1183 = vadd.xlane.f32.xlu0 %v1125
      %v1184 = vpop.xlane.xlu0 %1183
      %1185 = vadd.xlane.f32.xlu0 %v1126
      %v1186 = vpop.xlane.xlu0 %1185
      %1187 = vadd.xlane.f32.xlu0 %v1127
      %v1188 = vpop.xlane.xlu0 %1187
      %1189 = vadd.xlane.f32.xlu0 %v1128
      %v1190 = vpop.xlane.xlu0 %1189
      %1191 = vadd.xlane.f32.xlu0 %v1129
      %v1192 = vpop.xlane.xlu0 %1191
      %1193 = vadd.xlane.f32.xlu0 %v1130
      %v1194 = vpop.xlane.xlu0 %1193
      %s1195 = sld [smem:[#allocation2]]
      %v1196 = vstv %s1195
      %v1197 = vadd.f32 %v1132, %v1196
      %v1198 = vadd.f32 %v1134, %v1196
      %v1199 = vadd.f32 %v1136, %v1196
      %v1200 = vadd.f32 %v1138, %v1196
      %v1201 = vadd.f32 %v1140, %v1196
      %v1202 = vadd.f32 %v1142, %v1196
      %v1203 = vadd.f32 %v1144, %v1196
      %v1204 = vadd.f32 %v1146, %v1196
      %v1205 = vadd.f32 %v1148, %v1196
      %v1206 = vadd.f32 %v1150, %v1196
      %v1207 = vadd.f32 %v1152, %v1196
      %v1208 = vadd.f32 %v1154, %v1196
      %v1209 = vadd.f32 %v1156, %v1196
      %v1210 = vadd.f32 %v1158, %v1196
      %v1211 = vadd.f32 %v1160, %v1196
      %v1212 = vadd.f32 %v1162, %v1196
      %v1213 = vadd.f32 %v1164, %v1196
      %v1214 = vadd.f32 %v1166, %v1196
      %v1215 = vadd.f32 %v1168, %v1196
      %v1216 = vadd.f32 %v1170, %v1196
      %v1217 = vadd.f32 %v1172, %v1196
      %v1218 = vadd.f32 %v1174, %v1196
      %v1219 = vadd.f32 %v1176, %v1196
      %v1220 = vadd.f32 %v1178, %v1196
      %v1221 = vadd.f32 %v1180, %v1196
      %v1222 = vadd.f32 %v1182, %v1196
      %v1223 = vadd.f32 %v1184, %v1196
      %v1224 = vadd.f32 %v1186, %v1196
      %v1225 = vadd.f32 %v1188, %v1196
      %v1226 = vadd.f32 %v1190, %v1196
      %v1227 = vadd.f32 %v1192, %v1196
      %v1228 = vadd.f32 %v1194, %v1196
      %v1229 = vxor.u32 %v1197, 2147483648
      %v1230 = vxor.u32 %v1198, 2147483648
      %v1231 = vxor.u32 %v1199, 2147483648
      %v1232 = vxor.u32 %v1200, 2147483648
      %v1233 = vxor.u32 %v1201, 2147483648
      %v1234 = vxor.u32 %v1202, 2147483648
      %v1235 = vxor.u32 %v1203, 2147483648
      %v1236 = vxor.u32 %v1204, 2147483648
      %v1237 = vxor.u32 %v1205, 2147483648
      %v1238 = vxor.u32 %v1206, 2147483648
      %v1239 = vxor.u32 %v1207, 2147483648
      %v1240 = vxor.u32 %v1208, 2147483648
      %v1241 = vxor.u32 %v1209, 2147483648
      %v1242 = vxor.u32 %v1210, 2147483648
      %v1243 = vxor.u32 %v1211, 2147483648
      %v1244 = vxor.u32 %v1212, 2147483648
      %v1245 = vxor.u32 %v1213, 2147483648
      %v1246 = vxor.u32 %v1214, 2147483648
      %v1247 = vxor.u32 %v1215, 2147483648
      %v1248 = vxor.u32 %v1216, 2147483648
      %v1249 = vxor.u32 %v1217, 2147483648
      %v1250 = vxor.u32 %v1218, 2147483648
      %v1251 = vxor.u32 %v1219, 2147483648
      %v1252 = vxor.u32 %v1220, 2147483648
      %v1253 = vxor.u32 %v1221, 2147483648
      %v1254 = vxor.u32 %v1222, 2147483648
      %v1255 = vxor.u32 %v1223, 2147483648
      %v1256 = vxor.u32 %v1224, 2147483648
      %v1257 = vxor.u32 %v1225, 2147483648
      %v1258 = vxor.u32 %v1226, 2147483648
      %v1259 = vxor.u32 %v1227, 2147483648
      %v1260 = vxor.u32 %v1228, 2147483648
      %v1261 = vmul.f32 %v1229, 1.442695
      %v1262 = vpow.pop %v1261
      %v1263 = vmul.f32 %v1230, 1.442695
      %v1264 = vpow.pop %v1263
      %v1265 = vmul.f32 %v1231, 1.442695
      %v1266 = vpow.pop %v1265
      %v1267 = vmul.f32 %v1232, 1.442695
      %v1268 = vpow.pop %v1267
      %v1269 = vmul.f32 %v1233, 1.442695
      %v1270 = vpow.pop %v1269
      %v1271 = vmul.f32 %v1234, 1.442695
      %v1272 = vpow.pop %v1271
      %v1273 = vmul.f32 %v1235, 1.442695
      %v1274 = vpow.pop %v1273
      %v1275 = vmul.f32 %v1236, 1.442695
      %v1276 = vpow.pop %v1275
      %v1277 = vmul.f32 %v1237, 1.442695
      %v1278 = vpow.pop %v1277
      %v1279 = vmul.f32 %v1238, 1.442695
      %v1280 = vpow.pop %v1279
      %v1281 = vmul.f32 %v1239, 1.442695
      %v1282 = vpow.pop %v1281
      %v1283 = vmul.f32 %v1240, 1.442695
      %v1284 = vpow.pop %v1283
      %v1285 = vmul.f32 %v1241, 1.442695
      %v1286 = vpow.pop %v1285
      %v1287 = vmul.f32 %v1242, 1.442695
      %v1288 = vpow.pop %v1287
      %v1289 = vmul.f32 %v1243, 1.442695
      %v1290 = vpow.pop %v1289
      %v1291 = vmul.f32 %v1244, 1.442695
      %v1292 = vpow.pop %v1291
      %v1293 = vmul.f32 %v1245, 1.442695
      %v1294 = vpow.pop %v1293
      %v1295 = vmul.f32 %v1246, 1.442695
      %v1296 = vpow.pop %v1295
      %v1297 = vmul.f32 %v1247, 1.442695
      %v1298 = vpow.pop %v1297
      %v1299 = vmul.f32 %v1248, 1.442695
      %v1300 = vpow.pop %v1299
      %v1301 = vmul.f32 %v1249, 1.442695
      %v1302 = vpow.pop %v1301
      %v1303 = vmul.f32 %v1250, 1.442695
      %v1304 = vpow.pop %v1303
      %v1305 = vmul.f32 %v1251, 1.442695
      %v1306 = vpow.pop %v1305
      %v1307 = vmul.f32 %v1252, 1.442695
      %v1308 = vpow.pop %v1307
      %v1309 = vmul.f32 %v1253, 1.442695
      %v1310 = vpow.pop %v1309
      %v1311 = vmul.f32 %v1254, 1.442695
      %v1312 = vpow.pop %v1311
      %v1313 = vmul.f32 %v1255, 1.442695
      %v1314 = vpow.pop %v1313
      %v1315 = vmul.f32 %v1256, 1.442695
      %v1316 = vpow.pop %v1315
      %v1317 = vmul.f32 %v1257, 1.442695
      %v1318 = vpow.pop %v1317
      %v1319 = vmul.f32 %v1258, 1.442695
      %v1320 = vpow.pop %v1319
      %v1321 = vmul.f32 %v1259, 1.442695
      %v1322 = vpow.pop %v1321
      %v1323 = vmul.f32 %v1260, 1.442695
      %v1324 = vpow.pop %v1323
      %v1325 = vadd.f32 %v1262, 1.0
      %v1326 = vadd.f32 %v1264, 1.0
      %v1327 = vadd.f32 %v1266, 1.0
      %v1328 = vadd.f32 %v1268, 1.0
      %v1329 = vadd.f32 %v1270, 1.0
      %v1330 = vadd.f32 %v1272, 1.0
      %v1331 = vadd.f32 %v1274, 1.0
      %v1332 = vadd.f32 %v1276, 1.0
      %v1333 = vadd.f32 %v1278, 1.0
      %v1334 = vadd.f32 %v1280, 1.0
      %v1335 = vadd.f32 %v1282, 1.0
      %v1336 = vadd.f32 %v1284, 1.0
      %v1337 = vadd.f32 %v1286, 1.0
      %v1338 = vadd.f32 %v1288, 1.0
      %v1339 = vadd.f32 %v1290, 1.0
      %v1340 = vadd.f32 %v1292, 1.0
      %v1341 = vadd.f32 %v1294, 1.0
      %v1342 = vadd.f32 %v1296, 1.0
      %v1343 = vadd.f32 %v1298, 1.0
      %v1344 = vadd.f32 %v1300, 1.0
      %v1345 = vadd.f32 %v1302, 1.0
      %v1346 = vadd.f32 %v1304, 1.0
      %v1347 = vadd.f32 %v1306, 1.0
      %v1348 = vadd.f32 %v1308, 1.0
      %v1349 = vadd.f32 %v1310, 1.0
      %v1350 = vadd.f32 %v1312, 1.0
      %v1351 = vadd.f32 %v1314, 1.0
      %v1352 = vadd.f32 %v1316, 1.0
      %v1353 = vadd.f32 %v1318, 1.0
      %v1354 = vadd.f32 %v1320, 1.0
      %v1355 = vadd.f32 %v1322, 1.0
      %v1356 = vadd.f32 %v1324, 1.0
      %v1357 = vrcp.pop %v1325
      %v1358 = vmul.f32 1.0, %v1357
      %v1359 = vrcp.pop %v1326
      %v1360 = vmul.f32 1.0, %v1359
      %v1361 = vrcp.pop %v1327
      %v1362 = vmul.f32 1.0, %v1361
      %v1363 = vrcp.pop %v1328
      %v1364 = vmul.f32 1.0, %v1363
      %v1365 = vrcp.pop %v1329
      %v1366 = vmul.f32 1.0, %v1365
      %v1367 = vrcp.pop %v1330
      %v1368 = vmul.f32 1.0, %v1367
      %v1369 = vrcp.pop %v1331
      %v1370 = vmul.f32 1.0, %v1369
      %v1371 = vrcp.pop %v1332
      %v1372 = vmul.f32 1.0, %v1371
      %v1373 = vrcp.pop %v1333
      %v1374 = vmul.f32 1.0, %v1373
      %v1375 = vrcp.pop %v1334
      %v1376 = vmul.f32 1.0, %v1375
      %v1377 = vrcp.pop %v1335
      %v1378 = vmul.f32 1.0, %v1377
      %v1379 = vrcp.pop %v1336
      %v1380 = vmul.f32 1.0, %v1379
      %v1381 = vrcp.pop %v1337
      %v1382 = vmul.f32 1.0, %v1381
      %v1383 = vrcp.pop %v1338
      %v1384 = vmul.f32 1.0, %v1383
      %v1385 = vrcp.pop %v1339
      %v1386 = vmul.f32 1.0, %v1385
      %v1387 = vrcp.pop %v1340
      %v1388 = vmul.f32 1.0, %v1387
      %v1389 = vrcp.pop %v1341
      %v1390 = vmul.f32 1.0, %v1389
      %v1391 = vrcp.pop %v1342
      %v1392 = vmul.f32 1.0, %v1391
      %v1393 = vrcp.pop %v1343
      %v1394 = vmul.f32 1.0, %v1393
      %v1395 = vrcp.pop %v1344
      %v1396 = vmul.f32 1.0, %v1395
      %v1397 = vrcp.pop %v1345
      %v1398 = vmul.f32 1.0, %v1397
      %v1399 = vrcp.pop %v1346
      %v1400 = vmul.f32 1.0, %v1399
      %v1401 = vrcp.pop %v1347
      %v1402 = vmul.f32 1.0, %v1401
      %v1403 = vrcp.pop %v1348
      %v1404 = vmul.f32 1.0, %v1403
      %v1405 = vrcp.pop %v1349
      %v1406 = vmul.f32 1.0, %v1405
      %v1407 = vrcp.pop %v1350
      %v1408 = vmul.f32 1.0, %v1407
      %v1409 = vrcp.pop %v1351
      %v1410 = vmul.f32 1.0, %v1409
      %v1411 = vrcp.pop %v1352
      %v1412 = vmul.f32 1.0, %v1411
      %v1413 = vrcp.pop %v1353
      %v1414 = vmul.f32 1.0, %v1413
      %v1415 = vrcp.pop %v1354
      %v1416 = vmul.f32 1.0, %v1415
      %v1417 = vrcp.pop %v1355
      %v1418 = vmul.f32 1.0, %v1417
      %v1419 = vrcp.pop %v1356
      %v1420 = vmul.f32 1.0, %v1419
      %v1421 = vmul.f32 %v338, %v1358
      %v1422 = vmul.f32 %v339, %v1360
      %v1423 = vmul.f32 %v340, %v1362
      %v1424 = vmul.f32 %v341, %v1364
      %v1425 = vmul.f32 %v342, %v1366
      %v1426 = vmul.f32 %v343, %v1368
      %v1427 = vmul.f32 %v344, %v1370
      %v1428 = vmul.f32 %v345, %v1372
      %v1429 = vmul.f32 %v346, %v1374
      %v1430 = vmul.f32 %v347, %v1376
      %v1431 = vmul.f32 %v348, %v1378
      %v1432 = vmul.f32 %v349, %v1380
      %v1433 = vmul.f32 %v350, %v1382
      %v1434 = vmul.f32 %v351, %v1384
      %v1435 = vmul.f32 %v352, %v1386
      %v1436 = vmul.f32 %v353, %v1388
      %v1437 = vmul.f32 %v354, %v1390
      %v1438 = vmul.f32 %v355, %v1392
      %v1439 = vmul.f32 %v356, %v1394
      %v1440 = vmul.f32 %v357, %v1396
      %v1441 = vmul.f32 %v358, %v1398
      %v1442 = vmul.f32 %v359, %v1400
      %v1443 = vmul.f32 %v360, %v1402
      %v1444 = vmul.f32 %v361, %v1404
      %v1445 = vmul.f32 %v362, %v1406
      %v1446 = vmul.f32 %v363, %v1408
      %v1447 = vmul.f32 %v364, %v1410
      %v1448 = vmul.f32 %v365, %v1412
      %v1449 = vmul.f32 %v366, %v1414
      %v1450 = vmul.f32 %v367, %v1416
      %v1451 = vmul.f32 %v368, %v1418
      %v1452 = vmul.f32 %v369, %v1420
      %1453 = vst.msk [vmem:[%s303] sm:$0xff] %vm371, %v1421
      %1454 = vst.msk [vmem:[%s303 + $0x8] sm:$0xff] %vm371, %v1422
      %1455 = vst.msk [vmem:[%s303 + $0x10] sm:$0xff] %vm371, %v1423
      %1456 = vst.msk [vmem:[%s303 + $0x18] sm:$0xff] %vm371, %v1424
      %1457 = vst.msk [vmem:[%s303 + $0x20] sm:$0xff] %vm371, %v1425
      %1458 = vst.msk [vmem:[%s303 + $0x28] sm:$0xff] %vm371, %v1426
      %1459 = vst.msk [vmem:[%s303 + $0x30] sm:$0xff] %vm371, %v1427
      %1460 = vst.msk [vmem:[%s303 + $0x38] sm:$0xff] %vm371, %v1428
      %1461 = vst.msk [vmem:[%s303 + $0x40] sm:$0xff] %vm371, %v1429
      %1462 = vst.msk [vmem:[%s303 + $0x48] sm:$0xff] %vm371, %v1430
      %1463 = vst.msk [vmem:[%s303 + $0x50] sm:$0xff] %vm371, %v1431
      %1464 = vst.msk [vmem:[%s303 + $0x58] sm:$0xff] %vm371, %v1432
      %1465 = vst.msk [vmem:[%s303 + $0x60] sm:$0xff] %vm371, %v1433
      %1466 = vst.msk [vmem:[%s303 + $0x68] sm:$0xff] %vm371, %v1434
      %1467 = vst.msk [vmem:[%s303 + $0x70] sm:$0xff] %vm371, %v1435
      %1468 = vst.msk [vmem:[%s303 + $0x78] sm:$0xff] %vm371, %v1436
      %1469 = vst.msk [vmem:[%s303 + $0x80] sm:$0xff] %vm371, %v1437
      %1470 = vst.msk [vmem:[%s303 + $0x88] sm:$0xff] %vm371, %v1438
      %1471 = vst.msk [vmem:[%s303 + $0x90] sm:$0xff] %vm371, %v1439
      %1472 = vst.msk [vmem:[%s303 + $0x98] sm:$0xff] %vm371, %v1440
      %1473 = vst.msk [vmem:[%s303 + $0xa0] sm:$0xff] %vm371, %v1441
      %1474 = vst.msk [vmem:[%s303 + $0xa8] sm:$0xff] %vm371, %v1442
      %1475 = vst.msk [vmem:[%s303 + $0xb0] sm:$0xff] %vm371, %v1443
      %1476 = vst.msk [vmem:[%s303 + $0xb8] sm:$0xff] %vm371, %v1444
      %1477 = vst.msk [vmem:[%s303 + $0xc0] sm:$0xff] %vm371, %v1445
      %1478 = vst.msk [vmem:[%s303 + $0xc8] sm:$0xff] %vm371, %v1446
      %1479 = vst.msk [vmem:[%s303 + $0xd0] sm:$0xff] %vm371, %v1447
      %1480 = vst.msk [vmem:[%s303 + $0xd8] sm:$0xff] %vm371, %v1448
      %1481 = vst.msk [vmem:[%s303 + $0xe0] sm:$0xff] %vm371, %v1449
      %1482 = vst.msk [vmem:[%s303 + $0xe8] sm:$0xff] %vm371, %v1450
      %1483 = vst.msk [vmem:[%s303 + $0xf0] sm:$0xff] %vm371, %v1451
      %1484 = vst.msk [vmem:[%s303 + $0xf8] sm:$0xff] %vm371, %v1452
      %s1485 = smul.u32 32, %s19
      %p1486 = scmp.lt.s32.totalorder %s1485, 63
      %s1487 = scalar_select %p1486, %s1485, 63
      %s1488 = smul.addr %s1487, 8
      %s1489 = scalar_lea.vmem %s7, %s1488
      // Predicated region
      $region49: #{tpu_custom_call.1} parent=47 // pred_check
        %p1490 = pneg %p194
      $region50: #{tpu_custom_call.1} parent=47 // pred_check_branch
        %1492 = sbr.rel (%p1490) target = $region52
      $region51: #{tpu_custom_call.1} parent=47 // pred_region
        %s1493 = smul.u32 32, %s19
      $region52: #{tpu_custom_call.1} parent=47 // pred_fallthru
        _
    $region48: #{tpu_custom_call.1} parent=5 // pred_fallthru
      _
    %p1494 = scmp.le.s32.totalorder 2, %s14
    // Predicated region
    $region53: #{tpu_custom_call.1} parent=5 // pred_check
      %p1495 = pneg %p1494
    $region54: #{tpu_custom_call.1} parent=5 // pred_check_branch
      %1497 = sbr.rel (%p1495) target = $region56
    $region55: #{tpu_custom_call.1} parent=5 // pred_region
      %s1498 = ssub.s32 %s14, 2
      // Predicated region
      $region57: #{tpu_custom_call.1} parent=55 // pred_check
        %p1499 = pneg %p200
      $region58: #{tpu_custom_call.1} parent=55 // pred_check_branch
        %1501 = sbr.rel (%p1499) target = $region60
      $region59: #{tpu_custom_call.1} parent=55 // pred_region
        %s1502 = smul.u32 32, %s20
        %p1503 = scmp.lt.s32.totalorder %s1502, 63
        %s1504 = scalar_select %p1503, %s1502, 63
        %s1505 = smul.addr %s1504, 8
        %s1506 = scalar_lea.vmem %s7, %s1505
      $region60: #{tpu_custom_call.1} parent=55 // pred_fallthru
        _
    $region56: #{tpu_custom_call.1} parent=5 // pred_fallthru
      _
  $region6: #{tpu_custom_call.1} parent=0 // loop_footer
    %s18 = sadd.s32 1, %s14
  $region7: #{tpu_custom_call.1} parent=0 // loop_footer_branch
    %13 = sbr.rel target = $region3
  $region8: #{tpu_custom_call.1} parent=0 // loop_exit
    _

</llo_original>
